<compile_context>
chip_gen: v7x
topology: tpu7x:2x2x1
jax: 0.10.0
libtpu: 0.0.40
codegen_flags: <defaults>
</compile_context>

<pallas_src>
import jax
import jax.numpy as jnp
from jax import lax
from jax.experimental import pallas as pl
from jax.experimental.pallas import tpu as pltpu


def _vmem_spec():
    return pl.BlockSpec(memory_space=pltpu.MemorySpace.VMEM)


# ---------------------------------------------------------------------------
# Fused GCN -> RNN -> GCN kernel (whole working set < 4 KB -> one VMEM block).
# ---------------------------------------------------------------------------
def gcrnn_kernel(a_ref, x_ref, w1_ref, b1_ref, wih_t_ref, whh_t_ref, brnn_ref,
                 w2_ref, b2_ref, out_ref, h2_ref):
    a = a_ref[...]                                            # (N, N), loaded once

    # ---- GCN layer 1: h1 = A_hat @ (X @ W1) + b1 ---------------------- (N, 12)
    xw1 = jnp.dot(x_ref[...], w1_ref[...], preferred_element_type=jnp.float32)
    h1 = jnp.dot(a, xw1, preferred_element_type=jnp.float32) + b1_ref[...]

    # ---- Elman RNN (tanh), batch = 1, node axis = time axis ----------- (N, 16)
    # Hoisted input projection + folded bias:  xw[t] = h1[t] @ W_ih^T + (b_ih+b_hh)
    xw = jnp.dot(h1, wih_t_ref[...], preferred_element_type=jnp.float32) + brnn_ref[...]
    whh_t = whh_t_ref[...]                                    # (16, 16), resident

    n_steps = x_ref.shape[0]
    hidden = whh_t_ref.shape[0]
    h = jnp.zeros((1, hidden), jnp.float32)
    # Fully unrolled (N static, tiny): per-step critical path is one MXU push
    # + one VPU add + one EUP tanh; the hidden state never round-trips HBM.
    for t in range(n_steps):
        h = jnp.tanh(xw[t:t + 1, :] +
                     jnp.dot(h, whh_t, preferred_element_type=jnp.float32))
        h2_ref[t:t + 1, :] = h                                # static-row VMEM store
    h2 = h2_ref[...]                                          # (N, 16)

    # ---- GCN layer 2: out = A_hat @ (h2 @ W2) + b2 --------------------- (N, 2)
    xw2 = jnp.dot(h2, w2_ref[...], preferred_element_type=jnp.float32)
    out_ref[...] = jnp.dot(a, xw2, preferred_element_type=jnp.float32) + b2_ref[...]


def gcrnn_fused(a_hat, x, params):
    n = x.shape[0]
    hidden = params["w_hh"].shape[0]
    f_out = params["w2"].shape[1]
    args = (
        a_hat,                                                # (N, N)
        x,                                                    # (N, 8)
        params["w1"], params["b1"].reshape(1, -1),            # (8,12), (1,12)
        params["w_ih"].T, params["w_hh"].T,                   # (12,16), (16,16)
        (params["b_ih"] + params["b_hh"]).reshape(1, -1),     # (1,16) folded bias
        params["w2"], params["b2"].reshape(1, -1),            # (16,2), (1,2)
    )
    return pl.pallas_call(
        gcrnn_kernel,
        out_shape=jax.ShapeDtypeStruct((n, f_out), jnp.float32),
        in_specs=[_vmem_spec() for _ in args],
        out_specs=_vmem_spec(),
        scratch_shapes=[pltpu.VMEM((n, hidden), jnp.float32)],
    )(*args)


# ---------------------------------------------------------------------------
# GCN symmetric normalization (dense), matching torch_geometric GCNConv
# defaults (add_self_loops=True via add_remaining_self_loops, normalize=True).
# Built with one-hot matmuls instead of scatter-add (no serialized scatter).
# ---------------------------------------------------------------------------
def gcn_norm_adj(edge_index, num_nodes):
    src, dst = edge_index[0], edge_index[1]
    not_self = (src != dst).astype(jnp.float32)
    oh_src = jax.nn.one_hot(src, num_nodes, dtype=jnp.float32)   # (E, N)
    oh_dst = jax.nn.one_hot(dst, num_nodes, dtype=jnp.float32)   # (E, N)
    # A[dst, src]: drop existing self loops, then add weight-1 self loops to
    # every node (add_remaining_self_loops semantics: existing self loop -> 1).
    a = (oh_dst * not_self[:, None]).T @ oh_src
    a = a + jnp.eye(num_nodes, dtype=jnp.float32)
    deg = jnp.sum(a, axis=1)                                     # in-degree (+1)
    d_inv_sqrt = jnp.where(deg > 0.0, lax.rsqrt(deg), 0.0)
    return d_inv_sqrt[:, None] * a * d_inv_sqrt[None, :]


@jax.jit
def gcrnn_forward(x, edge_index, params):
    n = x.shape[0]
    a_hat = gcn_norm_adj(edge_index, n)   # hoist out of the jit if edge_index static
    return gcrnn_fused(a_hat, x, params)


# pure-JAX reference for correctness checking
def gcrnn_reference(x, edge_index, params):
    n = x.shape[0]
    a_hat = gcn_norm_adj(edge_index, n)
    h = a_hat @ (x @ params["w1"]) + params["b1"][None, :]
    outs = []
    hs = jnp.zeros((16,), jnp.float32)
    for t in range(n):
        hs = jnp.tanh(h[t] @ params["w_ih"].T + params["b_ih"]
                      + hs @ params["w_hh"].T + params["b_hh"])
        outs.append(hs)
    h2 = jnp.stack(outs, axis=0)
    return a_hat @ (h2 @ params["w2"]) + params["b2"][None, :]


if __name__ == "__main__":
    key = jax.random.PRNGKey(0)
    keys = jax.random.split(key, 10)

    N, F_IN, E = 16, 8, 40

    # deterministic inputs
    x = jax.random.normal(keys[0], (N, F_IN), dtype=jnp.float32)
    src = jax.random.randint(keys[1], (E,), 0, N, dtype=jnp.int32)
    dst = jax.random.randint(keys[2], (E,), 0, N, dtype=jnp.int32)
    edge_index = jnp.stack([src, dst], axis=0)  # [2, E]

    # deterministic parameters (shapes from the module's __init__)
    params = {
        "w1":   0.1 * jax.random.normal(keys[3], (8, 12), dtype=jnp.float32),
        "b1":   0.1 * jax.random.normal(keys[4], (12,), dtype=jnp.float32),
        "w_ih": 0.1 * jax.random.normal(keys[5], (16, 12), dtype=jnp.float32),
        "w_hh": 0.1 * jax.random.normal(keys[6], (16, 16), dtype=jnp.float32),
        "b_ih": 0.1 * jax.random.normal(keys[7], (16,), dtype=jnp.float32),
        "b_hh": 0.1 * jax.random.normal(keys[8], (16,), dtype=jnp.float32),
        "w2":   0.1 * jax.random.normal(keys[9], (16, 2), dtype=jnp.float32),
        "b2":   jnp.zeros((2,), dtype=jnp.float32),
    }

    out = gcrnn_forward(x, edge_index, params)
    out = jax.block_until_ready(out)

    ref = gcrnn_reference(x, edge_index, params)
    assert out.shape == (N, 2), out.shape
    assert jnp.allclose(out, ref, atol=1e-4, rtol=1e-4), "mismatch vs reference"

    print("KERNEL_OK")
</pallas_src>

<mosaic_0001>
module attributes {stable_mosaic.version = 11 : i64} {
  func.func @gcrnn_kernel(%arg0: memref<16x16xf32, #tpu.memory_space<vmem>>, %arg1: memref<16x8xf32, #tpu.memory_space<vmem>>, %arg2: memref<8x12xf32, #tpu.memory_space<vmem>>, %arg3: memref<1x12xf32, #tpu.memory_space<vmem>>, %arg4: memref<12x16xf32, #tpu.memory_space<vmem>>, %arg5: memref<16x16xf32, #tpu.memory_space<vmem>>, %arg6: memref<1x16xf32, #tpu.memory_space<vmem>>, %arg7: memref<16x2xf32, #tpu.memory_space<vmem>>, %arg8: memref<1x2xf32, #tpu.memory_space<vmem>>, %arg9: memref<16x2xf32, #tpu.memory_space<vmem>>, %arg10: memref<16x16xf32, #tpu.memory_space<vmem>>) attributes {dimension_semantics = [], scalar_prefetch = 0 : i64, scratch_operands = 1 : i64, tpu.core_type = #tpu.core_type<tc>} {
    %c0 = arith.constant 0 : index
    %c0_0 = arith.constant 0 : index
    %0 = vector.load %arg0[%c0, %c0_0] : memref<16x16xf32, #tpu.memory_space<vmem>>, vector<16x16xf32>
    %c0_1 = arith.constant 0 : index
    %c0_2 = arith.constant 0 : index
    %1 = vector.load %arg1[%c0_1, %c0_2] : memref<16x8xf32, #tpu.memory_space<vmem>>, vector<16x8xf32>
    %c0_3 = arith.constant 0 : index
    %c0_4 = arith.constant 0 : index
    %2 = vector.load %arg2[%c0_3, %c0_4] : memref<8x12xf32, #tpu.memory_space<vmem>>, vector<8x12xf32>
    %cst = arith.constant dense<0.000000e+00> : vector<16x12xf32>
    %3 = tpu.matmul %1, %2, %cst {dimension_numbers = #tpu.dot_dimension_numbers<[1], [0], [0], [1], [0, 0, 1, 1], [], []>} : vector<16x8xf32>, vector<8x12xf32>, vector<16x12xf32> -> vector<16x12xf32>
    %cst_5 = arith.constant dense<0.000000e+00> : vector<16x12xf32>
    %4 = tpu.matmul %0, %3, %cst_5 {dimension_numbers = #tpu.dot_dimension_numbers<[1], [0], [0], [1], [0, 0, 1, 1], [], []>} : vector<16x16xf32>, vector<16x12xf32>, vector<16x12xf32> -> vector<16x12xf32>
    %c0_6 = arith.constant 0 : index
    %c0_7 = arith.constant 0 : index
    %5 = vector.load %arg3[%c0_6, %c0_7] : memref<1x12xf32, #tpu.memory_space<vmem>>, vector<1x12xf32>
    %6 = vector.broadcast %5 : vector<1x12xf32> to vector<16x12xf32>
    %7 = arith.addf %4, %6 : vector<16x12xf32>
    %c0_8 = arith.constant 0 : index
    %c0_9 = arith.constant 0 : index
    %8 = vector.load %arg4[%c0_8, %c0_9] : memref<12x16xf32, #tpu.memory_space<vmem>>, vector<12x16xf32>
    %cst_10 = arith.constant dense<0.000000e+00> : vector<16x16xf32>
    %9 = tpu.matmul %7, %8, %cst_10 {dimension_numbers = #tpu.dot_dimension_numbers<[1], [0], [0], [1], [0, 0, 1, 1], [], []>} : vector<16x12xf32>, vector<12x16xf32>, vector<16x16xf32> -> vector<16x16xf32>
    %c0_11 = arith.constant 0 : index
    %c0_12 = arith.constant 0 : index
    %10 = vector.load %arg6[%c0_11, %c0_12] : memref<1x16xf32, #tpu.memory_space<vmem>>, vector<1x16xf32>
    %11 = vector.broadcast %10 : vector<1x16xf32> to vector<16x16xf32>
    %12 = arith.addf %9, %11 : vector<16x16xf32>
    %c0_13 = arith.constant 0 : index
    %c0_14 = arith.constant 0 : index
    %13 = vector.load %arg5[%c0_13, %c0_14] : memref<16x16xf32, #tpu.memory_space<vmem>>, vector<16x16xf32>
    %cst_15 = arith.constant 0.000000e+00 : f32
    %14 = vector.broadcast %cst_15 : f32 to vector<1x16xf32>
    %15 = vector.extract_strided_slice %12 {offsets = [0, 0], sizes = [1, 16], strides = [1, 1]} : vector<16x16xf32> to vector<1x16xf32>
    %cst_16 = arith.constant dense<0.000000e+00> : vector<1x16xf32>
    %16 = tpu.matmul %14, %13, %cst_16 {dimension_numbers = #tpu.dot_dimension_numbers<[1], [0], [0], [1], [0, 0, 1, 1], [], []>} : vector<1x16xf32>, vector<16x16xf32>, vector<1x16xf32> -> vector<1x16xf32>
    %17 = arith.addf %15, %16 : vector<1x16xf32>
    %18 = math.tanh %17 : vector<1x16xf32>
    %c0_17 = arith.constant 0 : index
    %c0_18 = arith.constant 0 : index
    %19 = vector.load %arg10[%c0_17, %c0_18] : memref<16x16xf32, #tpu.memory_space<vmem>>, vector<1x16xf32>
    tpu.vector_store %arg10[%c0_17, %c0_18], %18 {strides = array<i32>} : memref<16x16xf32, #tpu.memory_space<vmem>>, vector<1x16xf32>,
    %20 = vector.extract_strided_slice %12 {offsets = [1, 0], sizes = [1, 16], strides = [1, 1]} : vector<16x16xf32> to vector<1x16xf32>
    %cst_19 = arith.constant dense<0.000000e+00> : vector<1x16xf32>
    %21 = tpu.matmul %18, %13, %cst_19 {dimension_numbers = #tpu.dot_dimension_numbers<[1], [0], [0], [1], [0, 0, 1, 1], [], []>} : vector<1x16xf32>, vector<16x16xf32>, vector<1x16xf32> -> vector<1x16xf32>
    %22 = arith.addf %20, %21 : vector<1x16xf32>
    %23 = math.tanh %22 : vector<1x16xf32>
    %c1 = arith.constant 1 : index
    %c0_20 = arith.constant 0 : index
    %24 = vector.load %arg10[%c1, %c0_20] : memref<16x16xf32, #tpu.memory_space<vmem>>, vector<1x16xf32>
    tpu.vector_store %arg10[%c1, %c0_20], %23 {strides = array<i32>} : memref<16x16xf32, #tpu.memory_space<vmem>>, vector<1x16xf32>,
    %25 = vector.extract_strided_slice %12 {offsets = [2, 0], sizes = [1, 16], strides = [1, 1]} : vector<16x16xf32> to vector<1x16xf32>
    %cst_21 = arith.constant dense<0.000000e+00> : vector<1x16xf32>
    %26 = tpu.matmul %23, %13, %cst_21 {dimension_numbers = #tpu.dot_dimension_numbers<[1], [0], [0], [1], [0, 0, 1, 1], [], []>} : vector<1x16xf32>, vector<16x16xf32>, vector<1x16xf32> -> vector<1x16xf32>
    %27 = arith.addf %25, %26 : vector<1x16xf32>
    %28 = math.tanh %27 : vector<1x16xf32>
    %c2 = arith.constant 2 : index
    %c0_22 = arith.constant 0 : index
    %29 = vector.load %arg10[%c2, %c0_22] : memref<16x16xf32, #tpu.memory_space<vmem>>, vector<1x16xf32>
    tpu.vector_store %arg10[%c2, %c0_22], %28 {strides = array<i32>} : memref<16x16xf32, #tpu.memory_space<vmem>>, vector<1x16xf32>,
    %30 = vector.extract_strided_slice %12 {offsets = [3, 0], sizes = [1, 16], strides = [1, 1]} : vector<16x16xf32> to vector<1x16xf32>
    %cst_23 = arith.constant dense<0.000000e+00> : vector<1x16xf32>
    %31 = tpu.matmul %28, %13, %cst_23 {dimension_numbers = #tpu.dot_dimension_numbers<[1], [0], [0], [1], [0, 0, 1, 1], [], []>} : vector<1x16xf32>, vector<16x16xf32>, vector<1x16xf32> -> vector<1x16xf32>
    %32 = arith.addf %30, %31 : vector<1x16xf32>
    %33 = math.tanh %32 : vector<1x16xf32>
    %c3 = arith.constant 3 : index
    %c0_24 = arith.constant 0 : index
    %34 = vector.load %arg10[%c3, %c0_24] : memref<16x16xf32, #tpu.memory_space<vmem>>, vector<1x16xf32>
    tpu.vector_store %arg10[%c3, %c0_24], %33 {strides = array<i32>} : memref<16x16xf32, #tpu.memory_space<vmem>>, vector<1x16xf32>,
    %35 = vector.extract_strided_slice %12 {offsets = [4, 0], sizes = [1, 16], strides = [1, 1]} : vector<16x16xf32> to vector<1x16xf32>
    %cst_25 = arith.constant dense<0.000000e+00> : vector<1x16xf32>
    %36 = tpu.matmul %33, %13, %cst_25 {dimension_numbers = #tpu.dot_dimension_numbers<[1], [0], [0], [1], [0, 0, 1, 1], [], []>} : vector<1x16xf32>, vector<16x16xf32>, vector<1x16xf32> -> vector<1x16xf32>
    %37 = arith.addf %35, %36 : vector<1x16xf32>
    %38 = math.tanh %37 : vector<1x16xf32>
    %c4 = arith.constant 4 : index
    %c0_26 = arith.constant 0 : index
    %39 = vector.load %arg10[%c4, %c0_26] : memref<16x16xf32, #tpu.memory_space<vmem>>, vector<1x16xf32>
    tpu.vector_store %arg10[%c4, %c0_26], %38 {strides = array<i32>} : memref<16x16xf32, #tpu.memory_space<vmem>>, vector<1x16xf32>,
    %40 = vector.extract_strided_slice %12 {offsets = [5, 0], sizes = [1, 16], strides = [1, 1]} : vector<16x16xf32> to vector<1x16xf32>
    %cst_27 = arith.constant dense<0.000000e+00> : vector<1x16xf32>
    %41 = tpu.matmul %38, %13, %cst_27 {dimension_numbers = #tpu.dot_dimension_numbers<[1], [0], [0], [1], [0, 0, 1, 1], [], []>} : vector<1x16xf32>, vector<16x16xf32>, vector<1x16xf32> -> vector<1x16xf32>
    %42 = arith.addf %40, %41 : vector<1x16xf32>
    %43 = math.tanh %42 : vector<1x16xf32>
    %c5 = arith.constant 5 : index
    %c0_28 = arith.constant 0 : index
    %44 = vector.load %arg10[%c5, %c0_28] : memref<16x16xf32, #tpu.memory_space<vmem>>, vector<1x16xf32>
    tpu.vector_store %arg10[%c5, %c0_28], %43 {strides = array<i32>} : memref<16x16xf32, #tpu.memory_space<vmem>>, vector<1x16xf32>,
    %45 = vector.extract_strided_slice %12 {offsets = [6, 0], sizes = [1, 16], strides = [1, 1]} : vector<16x16xf32> to vector<1x16xf32>
    %cst_29 = arith.constant dense<0.000000e+00> : vector<1x16xf32>
    %46 = tpu.matmul %43, %13, %cst_29 {dimension_numbers = #tpu.dot_dimension_numbers<[1], [0], [0], [1], [0, 0, 1, 1], [], []>} : vector<1x16xf32>, vector<16x16xf32>, vector<1x16xf32> -> vector<1x16xf32>
    %47 = arith.addf %45, %46 : vector<1x16xf32>
    %48 = math.tanh %47 : vector<1x16xf32>
    %c6 = arith.constant 6 : index
    %c0_30 = arith.constant 0 : index
    %49 = vector.load %arg10[%c6, %c0_30] : memref<16x16xf32, #tpu.memory_space<vmem>>, vector<1x16xf32>
    tpu.vector_store %arg10[%c6, %c0_30], %48 {strides = array<i32>} : memref<16x16xf32, #tpu.memory_space<vmem>>, vector<1x16xf32>,
    %50 = vector.extract_strided_slice %12 {offsets = [7, 0], sizes = [1, 16], strides = [1, 1]} : vector<16x16xf32> to vector<1x16xf32>
    %cst_31 = arith.constant dense<0.000000e+00> : vector<1x16xf32>
    %51 = tpu.matmul %48, %13, %cst_31 {dimension_numbers = #tpu.dot_dimension_numbers<[1], [0], [0], [1], [0, 0, 1, 1], [], []>} : vector<1x16xf32>, vector<16x16xf32>, vector<1x16xf32> -> vector<1x16xf32>
    %52 = arith.addf %50, %51 : vector<1x16xf32>
    %53 = math.tanh %52 : vector<1x16xf32>
    %c7 = arith.constant 7 : index
    %c0_32 = arith.constant 0 : index
    %54 = vector.load %arg10[%c7, %c0_32] : memref<16x16xf32, #tpu.memory_space<vmem>>, vector<1x16xf32>
    tpu.vector_store %arg10[%c7, %c0_32], %53 {strides = array<i32>} : memref<16x16xf32, #tpu.memory_space<vmem>>, vector<1x16xf32>,
    %55 = vector.extract_strided_slice %12 {offsets = [8, 0], sizes = [1, 16], strides = [1, 1]} : vector<16x16xf32> to vector<1x16xf32>
    %cst_33 = arith.constant dense<0.000000e+00> : vector<1x16xf32>
    %56 = tpu.matmul %53, %13, %cst_33 {dimension_numbers = #tpu.dot_dimension_numbers<[1], [0], [0], [1], [0, 0, 1, 1], [], []>} : vector<1x16xf32>, vector<16x16xf32>, vector<1x16xf32> -> vector<1x16xf32>
    %57 = arith.addf %55, %56 : vector<1x16xf32>
    %58 = math.tanh %57 : vector<1x16xf32>
    %c8 = arith.constant 8 : index
    %c0_34 = arith.constant 0 : index
    %59 = vector.load %arg10[%c8, %c0_34] : memref<16x16xf32, #tpu.memory_space<vmem>>, vector<1x16xf32>
    tpu.vector_store %arg10[%c8, %c0_34], %58 {strides = array<i32>} : memref<16x16xf32, #tpu.memory_space<vmem>>, vector<1x16xf32>,
    %60 = vector.extract_strided_slice %12 {offsets = [9, 0], sizes = [1, 16], strides = [1, 1]} : vector<16x16xf32> to vector<1x16xf32>
    %cst_35 = arith.constant dense<0.000000e+00> : vector<1x16xf32>
    %61 = tpu.matmul %58, %13, %cst_35 {dimension_numbers = #tpu.dot_dimension_numbers<[1], [0], [0], [1], [0, 0, 1, 1], [], []>} : vector<1x16xf32>, vector<16x16xf32>, vector<1x16xf32> -> vector<1x16xf32>
    %62 = arith.addf %60, %61 : vector<1x16xf32>
    %63 = math.tanh %62 : vector<1x16xf32>
    %c9 = arith.constant 9 : index
    %c0_36 = arith.constant 0 : index
    %64 = vector.load %arg10[%c9, %c0_36] : memref<16x16xf32, #tpu.memory_space<vmem>>, vector<1x16xf32>
    tpu.vector_store %arg10[%c9, %c0_36], %63 {strides = array<i32>} : memref<16x16xf32, #tpu.memory_space<vmem>>, vector<1x16xf32>,
    %65 = vector.extract_strided_slice %12 {offsets = [10, 0], sizes = [1, 16], strides = [1, 1]} : vector<16x16xf32> to vector<1x16xf32>
    %cst_37 = arith.constant dense<0.000000e+00> : vector<1x16xf32>
    %66 = tpu.matmul %63, %13, %cst_37 {dimension_numbers = #tpu.dot_dimension_numbers<[1], [0], [0], [1], [0, 0, 1, 1], [], []>} : vector<1x16xf32>, vector<16x16xf32>, vector<1x16xf32> -> vector<1x16xf32>
    %67 = arith.addf %65, %66 : vector<1x16xf32>
    %68 = math.tanh %67 : vector<1x16xf32>
    %c10 = arith.constant 10 : index
    %c0_38 = arith.constant 0 : index
    %69 = vector.load %arg10[%c10, %c0_38] : memref<16x16xf32, #tpu.memory_space<vmem>>, vector<1x16xf32>
    tpu.vector_store %arg10[%c10, %c0_38], %68 {strides = array<i32>} : memref<16x16xf32, #tpu.memory_space<vmem>>, vector<1x16xf32>,
    %70 = vector.extract_strided_slice %12 {offsets = [11, 0], sizes = [1, 16], strides = [1, 1]} : vector<16x16xf32> to vector<1x16xf32>
    %cst_39 = arith.constant dense<0.000000e+00> : vector<1x16xf32>
    %71 = tpu.matmul %68, %13, %cst_39 {dimension_numbers = #tpu.dot_dimension_numbers<[1], [0], [0], [1], [0, 0, 1, 1], [], []>} : vector<1x16xf32>, vector<16x16xf32>, vector<1x16xf32> -> vector<1x16xf32>
    %72 = arith.addf %70, %71 : vector<1x16xf32>
    %73 = math.tanh %72 : vector<1x16xf32>
    %c11 = arith.constant 11 : index
    %c0_40 = arith.constant 0 : index
    %74 = vector.load %arg10[%c11, %c0_40] : memref<16x16xf32, #tpu.memory_space<vmem>>, vector<1x16xf32>
    tpu.vector_store %arg10[%c11, %c0_40], %73 {strides = array<i32>} : memref<16x16xf32, #tpu.memory_space<vmem>>, vector<1x16xf32>,
    %75 = vector.extract_strided_slice %12 {offsets = [12, 0], sizes = [1, 16], strides = [1, 1]} : vector<16x16xf32> to vector<1x16xf32>
    %cst_41 = arith.constant dense<0.000000e+00> : vector<1x16xf32>
    %76 = tpu.matmul %73, %13, %cst_41 {dimension_numbers = #tpu.dot_dimension_numbers<[1], [0], [0], [1], [0, 0, 1, 1], [], []>} : vector<1x16xf32>, vector<16x16xf32>, vector<1x16xf32> -> vector<1x16xf32>
    %77 = arith.addf %75, %76 : vector<1x16xf32>
    %78 = math.tanh %77 : vector<1x16xf32>
    %c12 = arith.constant 12 : index
    %c0_42 = arith.constant 0 : index
    %79 = vector.load %arg10[%c12, %c0_42] : memref<16x16xf32, #tpu.memory_space<vmem>>, vector<1x16xf32>
    tpu.vector_store %arg10[%c12, %c0_42], %78 {strides = array<i32>} : memref<16x16xf32, #tpu.memory_space<vmem>>, vector<1x16xf32>,
    %80 = vector.extract_strided_slice %12 {offsets = [13, 0], sizes = [1, 16], strides = [1, 1]} : vector<16x16xf32> to vector<1x16xf32>
    %cst_43 = arith.constant dense<0.000000e+00> : vector<1x16xf32>
    %81 = tpu.matmul %78, %13, %cst_43 {dimension_numbers = #tpu.dot_dimension_numbers<[1], [0], [0], [1], [0, 0, 1, 1], [], []>} : vector<1x16xf32>, vector<16x16xf32>, vector<1x16xf32> -> vector<1x16xf32>
    %82 = arith.addf %80, %81 : vector<1x16xf32>
    %83 = math.tanh %82 : vector<1x16xf32>
    %c13 = arith.constant 13 : index
    %c0_44 = arith.constant 0 : index
    %84 = vector.load %arg10[%c13, %c0_44] : memref<16x16xf32, #tpu.memory_space<vmem>>, vector<1x16xf32>
    tpu.vector_store %arg10[%c13, %c0_44], %83 {strides = array<i32>} : memref<16x16xf32, #tpu.memory_space<vmem>>, vector<1x16xf32>,
    %85 = vector.extract_strided_slice %12 {offsets = [14, 0], sizes = [1, 16], strides = [1, 1]} : vector<16x16xf32> to vector<1x16xf32>
    %cst_45 = arith.constant dense<0.000000e+00> : vector<1x16xf32>
    %86 = tpu.matmul %83, %13, %cst_45 {dimension_numbers = #tpu.dot_dimension_numbers<[1], [0], [0], [1], [0, 0, 1, 1], [], []>} : vector<1x16xf32>, vector<16x16xf32>, vector<1x16xf32> -> vector<1x16xf32>
    %87 = arith.addf %85, %86 : vector<1x16xf32>
    %88 = math.tanh %87 : vector<1x16xf32>
    %c14 = arith.constant 14 : index
    %c0_46 = arith.constant 0 : index
    %89 = vector.load %arg10[%c14, %c0_46] : memref<16x16xf32, #tpu.memory_space<vmem>>, vector<1x16xf32>
    tpu.vector_store %arg10[%c14, %c0_46], %88 {strides = array<i32>} : memref<16x16xf32, #tpu.memory_space<vmem>>, vector<1x16xf32>,
    %90 = vector.extract_strided_slice %12 {offsets = [15, 0], sizes = [1, 16], strides = [1, 1]} : vector<16x16xf32> to vector<1x16xf32>
    %cst_47 = arith.constant dense<0.000000e+00> : vector<1x16xf32>
    %91 = tpu.matmul %88, %13, %cst_47 {dimension_numbers = #tpu.dot_dimension_numbers<[1], [0], [0], [1], [0, 0, 1, 1], [], []>} : vector<1x16xf32>, vector<16x16xf32>, vector<1x16xf32> -> vector<1x16xf32>
    %92 = arith.addf %90, %91 : vector<1x16xf32>
    %93 = math.tanh %92 : vector<1x16xf32>
    %c15 = arith.constant 15 : index
    %c0_48 = arith.constant 0 : index
    %94 = vector.load %arg10[%c15, %c0_48] : memref<16x16xf32, #tpu.memory_space<vmem>>, vector<1x16xf32>
    tpu.vector_store %arg10[%c15, %c0_48], %93 {strides = array<i32>} : memref<16x16xf32, #tpu.memory_space<vmem>>, vector<1x16xf32>,
    %c0_49 = arith.constant 0 : index
    %c0_50 = arith.constant 0 : index
    %95 = vector.load %arg10[%c0_49, %c0_50] : memref<16x16xf32, #tpu.memory_space<vmem>>, vector<16x16xf32>
    %c0_51 = arith.constant 0 : index
    %c0_52 = arith.constant 0 : index
    %96 = vector.load %arg7[%c0_51, %c0_52] : memref<16x2xf32, #tpu.memory_space<vmem>>, vector<16x2xf32>
    %cst_53 = arith.constant dense<0.000000e+00> : vector<16x2xf32>
    %97 = tpu.matmul %95, %96, %cst_53 {dimension_numbers = #tpu.dot_dimension_numbers<[1], [0], [0], [1], [0, 0, 1, 1], [], []>} : vector<16x16xf32>, vector<16x2xf32>, vector<16x2xf32> -> vector<16x2xf32>
    %cst_54 = arith.constant dense<0.000000e+00> : vector<16x2xf32>
    %98 = tpu.matmul %0, %97, %cst_54 {dimension_numbers = #tpu.dot_dimension_numbers<[1], [0], [0], [1], [0, 0, 1, 1], [], []>} : vector<16x16xf32>, vector<16x2xf32>, vector<16x2xf32> -> vector<16x2xf32>
    %c0_55 = arith.constant 0 : index
    %c0_56 = arith.constant 0 : index
    %99 = vector.load %arg8[%c0_55, %c0_56] : memref<1x2xf32, #tpu.memory_space<vmem>>, vector<1x2xf32>
    %100 = vector.broadcast %99 : vector<1x2xf32> to vector<16x2xf32>
    %101 = arith.addf %98, %100 : vector<16x2xf32>
    %c0_57 = arith.constant 0 : index
    %c0_58 = arith.constant 0 : index
    %102 = vector.load %arg9[%c0_57, %c0_58] : memref<16x2xf32, #tpu.memory_space<vmem>>, vector<16x2xf32>
    tpu.vector_store %arg9[%c0_57, %c0_58], %101 {strides = array<i32>} : memref<16x2xf32, #tpu.memory_space<vmem>>, vector<16x2xf32>,
    return
  }
}

</mosaic_0001>

<llo_original>
// kernel: gcrnn_forward.1
$region0: #{gcrnn_forward.1}
  #allocation0 [shape = 'u32[]', space=smem, size = 0x4, offset = 0x4, fixed_abs, tag = 'smem constant byte address 0x4 - core index']
  #allocation1 [shape = 'u32[144,128]{1,0:T(1,128)}', space=vmem, size = 0x12000, scoped, tag = 'internal scratch']
  #allocation2 [shape = 'f32[16,16]{1,0:T(8,128)}', space=vmem, size = 0x2000, scoped, tag = 'scratch operand']
  %s0 = inlined_call_operand.vmem [shape: f32[16,16], index: 0, kind: input, shape index: {}]
  %s1 = inlined_call_operand.vmem [shape: f32[16,8], index: 1, kind: input, shape index: {}]
  %s2 = inlined_call_operand.vmem [shape: f32[8,12], index: 2, kind: input, shape index: {}]
  %s3 = inlined_call_operand.vmem [shape: f32[1,12], index: 3, kind: input, shape index: {}]
  %s4 = inlined_call_operand.vmem [shape: f32[12,16], index: 4, kind: input, shape index: {}]
  %s5 = inlined_call_operand.vmem [shape: f32[16,16], index: 5, kind: input, shape index: {}]
  %s6 = inlined_call_operand.vmem [shape: f32[1,16], index: 6, kind: input, shape index: {}]
  %s7 = inlined_call_operand.vmem [shape: f32[16,2], index: 7, kind: input, shape index: {}]
  %s8 = inlined_call_operand.vmem [shape: f32[1,2], index: 8, kind: input, shape index: {}]
  %s9 = inlined_call_operand.vmem [shape: f32[16,2], index: 9, kind: output, shape index: {}]
  %s10 = sld [smem:[#allocation0]]
  $region46: #{gcrnn_forward.1} parent=0
    _
  %s12 = ssub.s32 1, %s10
  %s13 = scalar_select 0, %s12, %s10
  // Predicated region
  $region2: #{gcrnn_forward.1} parent=0 // pred_check
    _
  $region3: #{gcrnn_forward.1} parent=0 // pred_check_branch
    %15 = sbr.rel (0) target = $region5
  $region4: #{gcrnn_forward.1} parent=0 // pred_region
    _
  $region5: #{gcrnn_forward.1} parent=0 // pred_fallthru
    _
  // Predicated region
  $region6: #{gcrnn_forward.1} parent=0 // pred_check
    _
  $region7: #{gcrnn_forward.1} parent=0 // pred_check_branch
    %17 = sbr.rel (0) target = $region9
  $region8: #{gcrnn_forward.1} parent=0 // pred_region
    _
  $region9: #{gcrnn_forward.1} parent=0 // pred_fallthru
    _
  // Predicated region
  $region10: #{gcrnn_forward.1} parent=0 // pred_check
    _
  $region11: #{gcrnn_forward.1} parent=0 // pred_check_branch
    %19 = sbr.rel (0) target = $region13
  $region12: #{gcrnn_forward.1} parent=0 // pred_region
    _
  $region13: #{gcrnn_forward.1} parent=0 // pred_fallthru
    _
  // Predicated region
  $region14: #{gcrnn_forward.1} parent=0 // pred_check
    _
  $region15: #{gcrnn_forward.1} parent=0 // pred_check_branch
    %21 = sbr.rel (0) target = $region17
  $region16: #{gcrnn_forward.1} parent=0 // pred_region
    _
  $region17: #{gcrnn_forward.1} parent=0 // pred_fallthru
    _
  // Predicated region
  $region18: #{gcrnn_forward.1} parent=0 // pred_check
    _
  $region19: #{gcrnn_forward.1} parent=0 // pred_check_branch
    %23 = sbr.rel (0) target = $region21
  $region20: #{gcrnn_forward.1} parent=0 // pred_region
    _
  $region21: #{gcrnn_forward.1} parent=0 // pred_fallthru
    _
  // Predicated region
  $region22: #{gcrnn_forward.1} parent=0 // pred_check
    _
  $region23: #{gcrnn_forward.1} parent=0 // pred_check_branch
    %25 = sbr.rel (0) target = $region25
  $region24: #{gcrnn_forward.1} parent=0 // pred_region
    _
  $region25: #{gcrnn_forward.1} parent=0 // pred_fallthru
    _
  // Predicated region
  $region26: #{gcrnn_forward.1} parent=0 // pred_check
    _
  $region27: #{gcrnn_forward.1} parent=0 // pred_check_branch
    %27 = sbr.rel (0) target = $region29
  $region28: #{gcrnn_forward.1} parent=0 // pred_region
    _
  $region29: #{gcrnn_forward.1} parent=0 // pred_fallthru
    _
  // Predicated region
  $region30: #{gcrnn_forward.1} parent=0 // pred_check
    _
  $region31: #{gcrnn_forward.1} parent=0 // pred_check_branch
    %29 = sbr.rel (0) target = $region33
  $region32: #{gcrnn_forward.1} parent=0 // pred_region
    _
  $region33: #{gcrnn_forward.1} parent=0 // pred_fallthru
    _
  // Predicated region
  $region34: #{gcrnn_forward.1} parent=0 // pred_check
    _
  $region35: #{gcrnn_forward.1} parent=0 // pred_check_branch
    %31 = sbr.rel (0) target = $region37
  $region36: #{gcrnn_forward.1} parent=0 // pred_region
    _
  $region37: #{gcrnn_forward.1} parent=0 // pred_fallthru
    _
  %v32 = vld [vmem:[%s0] sm:$0xff]
  %v33 = vld [vmem:[%s0 + $0x8] sm:$0xff]
  %v34 = vld [vmem:[%s1] sm:$0xff]
  %v35 = vld [vmem:[%s1 + $0x8] sm:$0xff]
  %v36 = vld [vmem:[%s2] sm:$0xff]
  %vm37 = vcmask 64512
  %v39 = vsel %vm37, %v34, 0
  %v42 = vsel %vm37, %v35, 0
  %44 = vmatprep.subr.mxu0 0.0
  %45 = vmatpush1.msra.mxu0 %v36
  %46 = vmatprep.subr.mxu0 0.0
  %47 = vmatpush1.msra.mxu0 0.0
  %48 = vmatprep.subr.mxu0 0.0
  %49 = vmatpush1.msra.mxu0 0.0
  %50 = vmatprep.subr.mxu0 0.0
  %51 = vmatpush1.msra.mxu0 0.0
  %52 = vmatprep.subr.mxu0 0.0
  %53 = vmatpush1.msra.mxu0 0.0
  %54 = vmatprep.subr.mxu0 0.0
  %55 = vmatpush1.msra.mxu0 0.0
  %56 = vmatprep.subr.mxu0 0.0
  %57 = vmatpush1.msra.mxu0 0.0
  %58 = vmatprep.subr.mxu0 0.0
  %59 = vmatpush1.msra.mxu0 0.0
  %60 = vmatprep.subr.mxu0 0.0
  %61 = vmatpush1.msra.mxu0 0.0
  %62 = vmatprep.subr.mxu0 0.0
  %63 = vmatpush1.msra.mxu0 0.0
  %64 = vmatprep.subr.mxu0 0.0
  %65 = vmatpush1.msra.mxu0 0.0
  %66 = vmatprep.subr.mxu0 0.0
  %67 = vmatpush1.msra.mxu0 0.0
  %68 = vmatprep.subr.mxu0 0.0
  %69 = vmatpush1.msra.mxu0 0.0
  %70 = vmatprep.subr.mxu0 0.0
  %71 = vmatpush1.msra.mxu0 0.0
  %72 = vmatprep.subr.mxu0 0.0
  %73 = vmatpush1.msra.mxu0 0.0
  %74 = vmatprep.subr.mxu0 0.0
  %75 = vmatpush1.msra.mxu0 0.0
  %76 = vmatprep.subr.mxu0 0.0
  %77 = vmatpush1.msra.mxu0 0.0
  %78 = vmatprep.subr.mxu0 0.0
  %79 = vmatpush1.msra.mxu0 0.0
  %80 = vmatprep.subr.mxu0 0.0
  %81 = vmatpush1.msra.mxu0 0.0
  %82 = vmatprep.subr.mxu0 0.0
  %83 = vmatpush1.msra.mxu0 0.0
  %84 = vmatprep.subr.mxu0 0.0
  %85 = vmatpush1.msra.mxu0 0.0
  %86 = vmatprep.subr.mxu0 0.0
  %87 = vmatpush1.msra.mxu0 0.0
  %88 = vmatprep.subr.mxu0 0.0
  %89 = vmatpush1.msra.mxu0 0.0
  %90 = vmatprep.subr.mxu0 0.0
  %91 = vmatpush1.msra.mxu0 0.0
  %92 = vmatprep.subr.mxu0 0.0
  %93 = vmatpush1.msra.mxu0 0.0
  %94 = vmatprep.subr.mxu0 0.0
  %95 = vmatpush1.msra.mxu0 0.0
  %96 = vmatprep.subr.mxu0 0.0
  %97 = vmatpush1.msra.mxu0 0.0
  %98 = vmatprep.subr.mxu0 0.0
  %99 = vmatpush1.msra.mxu0 0.0
  %100 = vmatprep.subr.mxu0 0.0
  %101 = vmatpush1.msra.mxu0 0.0
  %102 = vmatprep.subr.mxu0 0.0
  %103 = vmatpush1.msra.mxu0 0.0
  %104 = vmatprep.subr.mxu0 0.0
  %105 = vmatpush1.msra.mxu0 0.0
  %106 = vmatprep.subr.mxu0 0.0
  %107 = vmatpush1.msra.mxu0 0.0
  %108 = vmatprep.mubr.f32.mxu0 0.0
  %109 = vmatmul.mubr.f32.gmra.mrb[0].mxu0 %v39
  %v110 = vpop.f32.mrb[0].mxu0
  %v111 = vadd.f32 0.0, %v110
  %v112 = vpop.f32.mrb[0].mxu0
  %113 = vmatprep.mubr.f32.mxu0 0.0
  %114 = vmatmul.mubr.f32.gmra.mrb[0].mxu0 %v42
  %v115 = vpop.f32.mrb[0].mxu0
  %v116 = vadd.f32 0.0, %v115
  %v117 = vpop.f32.mrb[0].mxu0
  %118 = vdwg.mxu0
  %v119 = vld [vmem:[%s3] sm:$0x1]
  %v121 = vlaneseq
  %v122 = vshrl.u32 %v121, 7
  %v123 = vsub.s32 0, %v122
  %v124 = vrot.slane %v119, %v123
  %vm126 = vcmask 130048
  %v128 = vsel %vm126, %v32, 0
  %v131 = vsel %vm126, %v33, 0
  %133 = vmatprep.subr.mxu0 0.0
  %134 = vmatpush1.msra.mxu0 %v111
  %135 = vmatprep.subr.mxu0 0.0
  %136 = vmatpush1.msra.mxu0 %v116
  %137 = vmatprep.subr.mxu0 0.0
  %138 = vmatpush1.msra.mxu0 0.0
  %139 = vmatprep.subr.mxu0 0.0
  %140 = vmatpush1.msra.mxu0 0.0
  %141 = vmatprep.subr.mxu0 0.0
  %142 = vmatpush1.msra.mxu0 0.0
  %143 = vmatprep.subr.mxu0 0.0
  %144 = vmatpush1.msra.mxu0 0.0
  %145 = vmatprep.subr.mxu0 0.0
  %146 = vmatpush1.msra.mxu0 0.0
  %147 = vmatprep.subr.mxu0 0.0
  %148 = vmatpush1.msra.mxu0 0.0
  %149 = vmatprep.subr.mxu0 0.0
  %150 = vmatpush1.msra.mxu0 0.0
  %151 = vmatprep.subr.mxu0 0.0
  %152 = vmatpush1.msra.mxu0 0.0
  %153 = vmatprep.subr.mxu0 0.0
  %154 = vmatpush1.msra.mxu0 0.0
  %155 = vmatprep.subr.mxu0 0.0
  %156 = vmatpush1.msra.mxu0 0.0
  %157 = vmatprep.subr.mxu0 0.0
  %158 = vmatpush1.msra.mxu0 0.0
  %159 = vmatprep.subr.mxu0 0.0
  %160 = vmatpush1.msra.mxu0 0.0
  %161 = vmatprep.subr.mxu0 0.0
  %162 = vmatpush1.msra.mxu0 0.0
  %163 = vmatprep.subr.mxu0 0.0
  %164 = vmatpush1.msra.mxu0 0.0
  %165 = vmatprep.subr.mxu0 0.0
  %166 = vmatpush1.msra.mxu0 0.0
  %167 = vmatprep.subr.mxu0 0.0
  %168 = vmatpush1.msra.mxu0 0.0
  %169 = vmatprep.subr.mxu0 0.0
  %170 = vmatpush1.msra.mxu0 0.0
  %171 = vmatprep.subr.mxu0 0.0
  %172 = vmatpush1.msra.mxu0 0.0
  %173 = vmatprep.subr.mxu0 0.0
  %174 = vmatpush1.msra.mxu0 0.0
  %175 = vmatprep.subr.mxu0 0.0
  %176 = vmatpush1.msra.mxu0 0.0
  %177 = vmatprep.subr.mxu0 0.0
  %178 = vmatpush1.msra.mxu0 0.0
  %179 = vmatprep.subr.mxu0 0.0
  %180 = vmatpush1.msra.mxu0 0.0
  %181 = vmatprep.subr.mxu0 0.0
  %182 = vmatpush1.msra.mxu0 0.0
  %183 = vmatprep.subr.mxu0 0.0
  %184 = vmatpush1.msra.mxu0 0.0
  %185 = vmatprep.subr.mxu0 0.0
  %186 = vmatpush1.msra.mxu0 0.0
  %187 = vmatprep.subr.mxu0 0.0
  %188 = vmatpush1.msra.mxu0 0.0
  %189 = vmatprep.subr.mxu0 0.0
  %190 = vmatpush1.msra.mxu0 0.0
  %191 = vmatprep.subr.mxu0 0.0
  %192 = vmatpush1.msra.mxu0 0.0
  %193 = vmatprep.subr.mxu0 0.0
  %194 = vmatpush1.msra.mxu0 0.0
  %195 = vmatprep.subr.mxu0 0.0
  %196 = vmatpush1.msra.mxu0 0.0
  %197 = vmatprep.mubr.f32.mxu0 0.0
  %198 = vmatmul.mubr.f32.gmra.mrb[0].mxu0 %v128
  %v199 = vpop.f32.mrb[0].mxu0
  %v200 = vadd.f32 %v124, %v199
  %v201 = vpop.f32.mrb[0].mxu0
  %202 = vmatprep.mubr.f32.mxu0 0.0
  %203 = vmatmul.mubr.f32.gmra.mrb[0].mxu0 %v131
  %v204 = vpop.f32.mrb[0].mxu0
  %v205 = vadd.f32 %v124, %v204
  %v206 = vpop.f32.mrb[0].mxu0
  %207 = vdwg.mxu0
  %v208 = vld [vmem:[%s4] sm:$0xff]
  %v209 = vld [vmem:[%s4 + $0x8] sm:$0xf]
  %v210 = vld [vmem:[%s6] sm:$0x1]
  %v212 = vlaneseq
  %v213 = vshrl.u32 %v212, 7
  %v214 = vsub.s32 0, %v213
  %v215 = vrot.slane %v210, %v214
  %vm217 = vcmask 97280
  %v219 = vsel %vm217, %v200, 0
  %v222 = vsel %vm217, %v205, 0
  %vm224 = vcmask 1043456
  %v226 = vsel %vm224, %v209, 0
  %228 = vmatprep.subr.mxu0 0.0
  %229 = vmatpush1.msra.mxu0 %v208
  %230 = vmatprep.subr.mxu0 0.0
  %231 = vmatpush1.msra.mxu0 %v226
  %232 = vmatprep.subr.mxu0 0.0
  %233 = vmatpush1.msra.mxu0 0.0
  %234 = vmatprep.subr.mxu0 0.0
  %235 = vmatpush1.msra.mxu0 0.0
  %236 = vmatprep.subr.mxu0 0.0
  %237 = vmatpush1.msra.mxu0 0.0
  %238 = vmatprep.subr.mxu0 0.0
  %239 = vmatpush1.msra.mxu0 0.0
  %240 = vmatprep.subr.mxu0 0.0
  %241 = vmatpush1.msra.mxu0 0.0
  %242 = vmatprep.subr.mxu0 0.0
  %243 = vmatpush1.msra.mxu0 0.0
  %244 = vmatprep.subr.mxu0 0.0
  %245 = vmatpush1.msra.mxu0 0.0
  %246 = vmatprep.subr.mxu0 0.0
  %247 = vmatpush1.msra.mxu0 0.0
  %248 = vmatprep.subr.mxu0 0.0
  %249 = vmatpush1.msra.mxu0 0.0
  %250 = vmatprep.subr.mxu0 0.0
  %251 = vmatpush1.msra.mxu0 0.0
  %252 = vmatprep.subr.mxu0 0.0
  %253 = vmatpush1.msra.mxu0 0.0
  %254 = vmatprep.subr.mxu0 0.0
  %255 = vmatpush1.msra.mxu0 0.0
  %256 = vmatprep.subr.mxu0 0.0
  %257 = vmatpush1.msra.mxu0 0.0
  %258 = vmatprep.subr.mxu0 0.0
  %259 = vmatpush1.msra.mxu0 0.0
  %260 = vmatprep.subr.mxu0 0.0
  %261 = vmatpush1.msra.mxu0 0.0
  %262 = vmatprep.subr.mxu0 0.0
  %263 = vmatpush1.msra.mxu0 0.0
  %264 = vmatprep.subr.mxu0 0.0
  %265 = vmatpush1.msra.mxu0 0.0
  %266 = vmatprep.subr.mxu0 0.0
  %267 = vmatpush1.msra.mxu0 0.0
  %268 = vmatprep.subr.mxu0 0.0
  %269 = vmatpush1.msra.mxu0 0.0
  %270 = vmatprep.subr.mxu0 0.0
  %271 = vmatpush1.msra.mxu0 0.0
  %272 = vmatprep.subr.mxu0 0.0
  %273 = vmatpush1.msra.mxu0 0.0
  %274 = vmatprep.subr.mxu0 0.0
  %275 = vmatpush1.msra.mxu0 0.0
  %276 = vmatprep.subr.mxu0 0.0
  %277 = vmatpush1.msra.mxu0 0.0
  %278 = vmatprep.subr.mxu0 0.0
  %279 = vmatpush1.msra.mxu0 0.0
  %280 = vmatprep.subr.mxu0 0.0
  %281 = vmatpush1.msra.mxu0 0.0
  %282 = vmatprep.subr.mxu0 0.0
  %283 = vmatpush1.msra.mxu0 0.0
  %284 = vmatprep.subr.mxu0 0.0
  %285 = vmatpush1.msra.mxu0 0.0
  %286 = vmatprep.subr.mxu0 0.0
  %287 = vmatpush1.msra.mxu0 0.0
  %288 = vmatprep.subr.mxu0 0.0
  %289 = vmatpush1.msra.mxu0 0.0
  %290 = vmatprep.subr.mxu0 0.0
  %291 = vmatpush1.msra.mxu0 0.0
  %292 = vmatprep.mubr.f32.mxu0 0.0
  %293 = vmatmul.mubr.f32.gmra.mrb[0].mxu0 %v219
  %v294 = vpop.f32.mrb[0].mxu0
  %v295 = vadd.f32 %v215, %v294
  %v296 = vpop.f32.mrb[0].mxu0
  %297 = vmatprep.mubr.f32.mxu0 0.0
  %298 = vmatmul.mubr.f32.gmra.mrb[0].mxu0 %v222
  %v299 = vpop.f32.mrb[0].mxu0
  %v300 = vadd.f32 %v215, %v299
  %v301 = vpop.f32.mrb[0].mxu0
  %302 = vdwg.mxu0
  %v303 = vld [vmem:[%s5] sm:$0xff]
  %v304 = vld [vmem:[%s5 + $0x8] sm:$0xff]
  %v306 = vsel %vm126, 0.0, 0
  %308 = vmatprep.subr.mxu0 0.0
  %309 = vmatpush1.msra.mxu0 %v303
  %310 = vmatprep.subr.mxu0 0.0
  %311 = vmatpush1.msra.mxu0 %v304
  %312 = vmatprep.subr.mxu0 0.0
  %313 = vmatpush1.msra.mxu0 0.0
  %314 = vmatprep.subr.mxu0 0.0
  %315 = vmatpush1.msra.mxu0 0.0
  %316 = vmatprep.subr.mxu0 0.0
  %317 = vmatpush1.msra.mxu0 0.0
  %318 = vmatprep.subr.mxu0 0.0
  %319 = vmatpush1.msra.mxu0 0.0
  %320 = vmatprep.subr.mxu0 0.0
  %321 = vmatpush1.msra.mxu0 0.0
  %322 = vmatprep.subr.mxu0 0.0
  %323 = vmatpush1.msra.mxu0 0.0
  %324 = vmatprep.subr.mxu0 0.0
  %325 = vmatpush1.msra.mxu0 0.0
  %326 = vmatprep.subr.mxu0 0.0
  %327 = vmatpush1.msra.mxu0 0.0
  %328 = vmatprep.subr.mxu0 0.0
  %329 = vmatpush1.msra.mxu0 0.0
  %330 = vmatprep.subr.mxu0 0.0
  %331 = vmatpush1.msra.mxu0 0.0
  %332 = vmatprep.subr.mxu0 0.0
  %333 = vmatpush1.msra.mxu0 0.0
  %334 = vmatprep.subr.mxu0 0.0
  %335 = vmatpush1.msra.mxu0 0.0
  %336 = vmatprep.subr.mxu0 0.0
  %337 = vmatpush1.msra.mxu0 0.0
  %338 = vmatprep.subr.mxu0 0.0
  %339 = vmatpush1.msra.mxu0 0.0
  %340 = vmatprep.subr.mxu0 0.0
  %341 = vmatpush1.msra.mxu0 0.0
  %342 = vmatprep.subr.mxu0 0.0
  %343 = vmatpush1.msra.mxu0 0.0
  %344 = vmatprep.subr.mxu0 0.0
  %345 = vmatpush1.msra.mxu0 0.0
  %346 = vmatprep.subr.mxu0 0.0
  %347 = vmatpush1.msra.mxu0 0.0
  %348 = vmatprep.subr.mxu0 0.0
  %349 = vmatpush1.msra.mxu0 0.0
  %350 = vmatprep.subr.mxu0 0.0
  %351 = vmatpush1.msra.mxu0 0.0
  %352 = vmatprep.subr.mxu0 0.0
  %353 = vmatpush1.msra.mxu0 0.0
  %354 = vmatprep.subr.mxu0 0.0
  %355 = vmatpush1.msra.mxu0 0.0
  %356 = vmatprep.subr.mxu0 0.0
  %357 = vmatpush1.msra.mxu0 0.0
  %358 = vmatprep.subr.mxu0 0.0
  %359 = vmatpush1.msra.mxu0 0.0
  %360 = vmatprep.subr.mxu0 0.0
  %361 = vmatpush1.msra.mxu0 0.0
  %362 = vmatprep.subr.mxu0 0.0
  %363 = vmatpush1.msra.mxu0 0.0
  %364 = vmatprep.subr.mxu0 0.0
  %365 = vmatpush1.msra.mxu0 0.0
  %366 = vmatprep.subr.mxu0 0.0
  %367 = vmatpush1.msra.mxu0 0.0
  %368 = vmatprep.subr.mxu0 0.0
  %369 = vmatpush1.msra.mxu0 0.0
  %370 = vmatprep.subr.mxu0 0.0
  %371 = vmatpush1.msra.mxu0 0.0
  %372 = vmatprep.mubr.f32.mxu0 0.0
  %373 = vmatmul.mubr.f32.gmra.mrb[0].mxu0 %v306
  %v374 = vpop.f32.mrb[0].mxu0
  %v375 = vadd.f32 0.0, %v374
  %v376 = vpop.f32.mrb[0].mxu0
  %377 = vdwg.mxu0
  %v378 = vadd.f32 %v295, %v375
  %v379 = vtanh.pop %v378
  %vm380 = vcmask 122880
  %381 = vst.msk [vmem:[#allocation2] sm:$0x1] %vm380, %v379
  %v383 = vsel %vm126, %v379, 0
  %385 = vmatprep.subr.mxu0 0.0
  %386 = vmatpush1.msra.mxu0 %v303
  %387 = vmatprep.subr.mxu0 0.0
  %388 = vmatpush1.msra.mxu0 %v304
  %389 = vmatprep.subr.mxu0 0.0
  %390 = vmatpush1.msra.mxu0 0.0
  %391 = vmatprep.subr.mxu0 0.0
  %392 = vmatpush1.msra.mxu0 0.0
  %393 = vmatprep.subr.mxu0 0.0
  %394 = vmatpush1.msra.mxu0 0.0
  %395 = vmatprep.subr.mxu0 0.0
  %396 = vmatpush1.msra.mxu0 0.0
  %397 = vmatprep.subr.mxu0 0.0
  %398 = vmatpush1.msra.mxu0 0.0
  %399 = vmatprep.subr.mxu0 0.0
  %400 = vmatpush1.msra.mxu0 0.0
  %401 = vmatprep.subr.mxu0 0.0
  %402 = vmatpush1.msra.mxu0 0.0
  %403 = vmatprep.subr.mxu0 0.0
  %404 = vmatpush1.msra.mxu0 0.0
  %405 = vmatprep.subr.mxu0 0.0
  %406 = vmatpush1.msra.mxu0 0.0
  %407 = vmatprep.subr.mxu0 0.0
  %408 = vmatpush1.msra.mxu0 0.0
  %409 = vmatprep.subr.mxu0 0.0
  %410 = vmatpush1.msra.mxu0 0.0
  %411 = vmatprep.subr.mxu0 0.0
  %412 = vmatpush1.msra.mxu0 0.0
  %413 = vmatprep.subr.mxu0 0.0
  %414 = vmatpush1.msra.mxu0 0.0
  %415 = vmatprep.subr.mxu0 0.0
  %416 = vmatpush1.msra.mxu0 0.0
  %417 = vmatprep.subr.mxu0 0.0
  %418 = vmatpush1.msra.mxu0 0.0
  %419 = vmatprep.subr.mxu0 0.0
  %420 = vmatpush1.msra.mxu0 0.0
  %421 = vmatprep.subr.mxu0 0.0
  %422 = vmatpush1.msra.mxu0 0.0
  %423 = vmatprep.subr.mxu0 0.0
  %424 = vmatpush1.msra.mxu0 0.0
  %425 = vmatprep.subr.mxu0 0.0
  %426 = vmatpush1.msra.mxu0 0.0
  %427 = vmatprep.subr.mxu0 0.0
  %428 = vmatpush1.msra.mxu0 0.0
  %429 = vmatprep.subr.mxu0 0.0
  %430 = vmatpush1.msra.mxu0 0.0
  %431 = vmatprep.subr.mxu0 0.0
  %432 = vmatpush1.msra.mxu0 0.0
  %433 = vmatprep.subr.mxu0 0.0
  %434 = vmatpush1.msra.mxu0 0.0
  %435 = vmatprep.subr.mxu0 0.0
  %436 = vmatpush1.msra.mxu0 0.0
  %437 = vmatprep.subr.mxu0 0.0
  %438 = vmatpush1.msra.mxu0 0.0
  %439 = vmatprep.subr.mxu0 0.0
  %440 = vmatpush1.msra.mxu0 0.0
  %441 = vmatprep.subr.mxu0 0.0
  %442 = vmatpush1.msra.mxu0 0.0
  %443 = vmatprep.subr.mxu0 0.0
  %444 = vmatpush1.msra.mxu0 0.0
  %445 = vmatprep.subr.mxu0 0.0
  %446 = vmatpush1.msra.mxu0 0.0
  %447 = vmatprep.subr.mxu0 0.0
  %448 = vmatpush1.msra.mxu0 0.0
  %449 = vmatprep.mubr.f32.mxu0 0.0
  %450 = vmatmul.mubr.f32.gmra.mrb[0].mxu0 %v383
  %v451 = vpop.f32.mrb[0].mxu0
  %v452 = vadd.f32 0.0, %v451
  %v453 = vpop.f32.mrb[0].mxu0
  %454 = vdwg.mxu0
  %v456 = vrot.slane %v452, 7
  %v458 = vadd.f32 %v295, %v456
  %v459 = vtanh.pop %v458
  %vm460 = vcmask 123905
  %461 = vst.msk [vmem:[#allocation2] sm:$0x2] %vm460, %v459
  %v463 = vrot.slane %v459, 1
  %v464 = vsel %vm126, %v463, 0
  %466 = vmatprep.subr.mxu0 0.0
  %467 = vmatpush1.msra.mxu0 %v303
  %468 = vmatprep.subr.mxu0 0.0
  %469 = vmatpush1.msra.mxu0 %v304
  %470 = vmatprep.subr.mxu0 0.0
  %471 = vmatpush1.msra.mxu0 0.0
  %472 = vmatprep.subr.mxu0 0.0
  %473 = vmatpush1.msra.mxu0 0.0
  %474 = vmatprep.subr.mxu0 0.0
  %475 = vmatpush1.msra.mxu0 0.0
  %476 = vmatprep.subr.mxu0 0.0
  %477 = vmatpush1.msra.mxu0 0.0
  %478 = vmatprep.subr.mxu0 0.0
  %479 = vmatpush1.msra.mxu0 0.0
  %480 = vmatprep.subr.mxu0 0.0
  %481 = vmatpush1.msra.mxu0 0.0
  %482 = vmatprep.subr.mxu0 0.0
  %483 = vmatpush1.msra.mxu0 0.0
  %484 = vmatprep.subr.mxu0 0.0
  %485 = vmatpush1.msra.mxu0 0.0
  %486 = vmatprep.subr.mxu0 0.0
  %487 = vmatpush1.msra.mxu0 0.0
  %488 = vmatprep.subr.mxu0 0.0
  %489 = vmatpush1.msra.mxu0 0.0
  %490 = vmatprep.subr.mxu0 0.0
  %491 = vmatpush1.msra.mxu0 0.0
  %492 = vmatprep.subr.mxu0 0.0
  %493 = vmatpush1.msra.mxu0 0.0
  %494 = vmatprep.subr.mxu0 0.0
  %495 = vmatpush1.msra.mxu0 0.0
  %496 = vmatprep.subr.mxu0 0.0
  %497 = vmatpush1.msra.mxu0 0.0
  %498 = vmatprep.subr.mxu0 0.0
  %499 = vmatpush1.msra.mxu0 0.0
  %500 = vmatprep.subr.mxu0 0.0
  %501 = vmatpush1.msra.mxu0 0.0
  %502 = vmatprep.subr.mxu0 0.0
  %503 = vmatpush1.msra.mxu0 0.0
  %504 = vmatprep.subr.mxu0 0.0
  %505 = vmatpush1.msra.mxu0 0.0
  %506 = vmatprep.subr.mxu0 0.0
  %507 = vmatpush1.msra.mxu0 0.0
  %508 = vmatprep.subr.mxu0 0.0
  %509 = vmatpush1.msra.mxu0 0.0
  %510 = vmatprep.subr.mxu0 0.0
  %511 = vmatpush1.msra.mxu0 0.0
  %512 = vmatprep.subr.mxu0 0.0
  %513 = vmatpush1.msra.mxu0 0.0
  %514 = vmatprep.subr.mxu0 0.0
  %515 = vmatpush1.msra.mxu0 0.0
  %516 = vmatprep.subr.mxu0 0.0
  %517 = vmatpush1.msra.mxu0 0.0
  %518 = vmatprep.subr.mxu0 0.0
  %519 = vmatpush1.msra.mxu0 0.0
  %520 = vmatprep.subr.mxu0 0.0
  %521 = vmatpush1.msra.mxu0 0.0
  %522 = vmatprep.subr.mxu0 0.0
  %523 = vmatpush1.msra.mxu0 0.0
  %524 = vmatprep.subr.mxu0 0.0
  %525 = vmatpush1.msra.mxu0 0.0
  %526 = vmatprep.subr.mxu0 0.0
  %527 = vmatpush1.msra.mxu0 0.0
  %528 = vmatprep.subr.mxu0 0.0
  %529 = vmatpush1.msra.mxu0 0.0
  %530 = vmatprep.mubr.f32.mxu0 0.0
  %531 = vmatmul.mubr.f32.gmra.mrb[0].mxu0 %v464
  %v532 = vpop.f32.mrb[0].mxu0
  %v533 = vadd.f32 0.0, %v532
  %v534 = vpop.f32.mrb[0].mxu0
  %535 = vdwg.mxu0
  %v537 = vrot.slane %v533, 6
  %v539 = vadd.f32 %v295, %v537
  %v540 = vtanh.pop %v539
  %vm541 = vcmask 124930
  %542 = vst.msk [vmem:[#allocation2] sm:$0x4] %vm541, %v540
  %v544 = vrot.slane %v540, 2
  %v545 = vsel %vm126, %v544, 0
  %547 = vmatprep.subr.mxu0 0.0
  %548 = vmatpush1.msra.mxu0 %v303
  %549 = vmatprep.subr.mxu0 0.0
  %550 = vmatpush1.msra.mxu0 %v304
  %551 = vmatprep.subr.mxu0 0.0
  %552 = vmatpush1.msra.mxu0 0.0
  %553 = vmatprep.subr.mxu0 0.0
  %554 = vmatpush1.msra.mxu0 0.0
  %555 = vmatprep.subr.mxu0 0.0
  %556 = vmatpush1.msra.mxu0 0.0
  %557 = vmatprep.subr.mxu0 0.0
  %558 = vmatpush1.msra.mxu0 0.0
  %559 = vmatprep.subr.mxu0 0.0
  %560 = vmatpush1.msra.mxu0 0.0
  %561 = vmatprep.subr.mxu0 0.0
  %562 = vmatpush1.msra.mxu0 0.0
  %563 = vmatprep.subr.mxu0 0.0
  %564 = vmatpush1.msra.mxu0 0.0
  %565 = vmatprep.subr.mxu0 0.0
  %566 = vmatpush1.msra.mxu0 0.0
  %567 = vmatprep.subr.mxu0 0.0
  %568 = vmatpush1.msra.mxu0 0.0
  %569 = vmatprep.subr.mxu0 0.0
  %570 = vmatpush1.msra.mxu0 0.0
  %571 = vmatprep.subr.mxu0 0.0
  %572 = vmatpush1.msra.mxu0 0.0
  %573 = vmatprep.subr.mxu0 0.0
  %574 = vmatpush1.msra.mxu0 0.0
  %575 = vmatprep.subr.mxu0 0.0
  %576 = vmatpush1.msra.mxu0 0.0
  %577 = vmatprep.subr.mxu0 0.0
  %578 = vmatpush1.msra.mxu0 0.0
  %579 = vmatprep.subr.mxu0 0.0
  %580 = vmatpush1.msra.mxu0 0.0
  %581 = vmatprep.subr.mxu0 0.0
  %582 = vmatpush1.msra.mxu0 0.0
  %583 = vmatprep.subr.mxu0 0.0
  %584 = vmatpush1.msra.mxu0 0.0
  %585 = vmatprep.subr.mxu0 0.0
  %586 = vmatpush1.msra.mxu0 0.0
  %587 = vmatprep.subr.mxu0 0.0
  %588 = vmatpush1.msra.mxu0 0.0
  %589 = vmatprep.subr.mxu0 0.0
  %590 = vmatpush1.msra.mxu0 0.0
  %591 = vmatprep.subr.mxu0 0.0
  %592 = vmatpush1.msra.mxu0 0.0
  %593 = vmatprep.subr.mxu0 0.0
  %594 = vmatpush1.msra.mxu0 0.0
  %595 = vmatprep.subr.mxu0 0.0
  %596 = vmatpush1.msra.mxu0 0.0
  %597 = vmatprep.subr.mxu0 0.0
  %598 = vmatpush1.msra.mxu0 0.0
  %599 = vmatprep.subr.mxu0 0.0
  %600 = vmatpush1.msra.mxu0 0.0
  %601 = vmatprep.subr.mxu0 0.0
  %602 = vmatpush1.msra.mxu0 0.0
  %603 = vmatprep.subr.mxu0 0.0
  %604 = vmatpush1.msra.mxu0 0.0
  %605 = vmatprep.subr.mxu0 0.0
  %606 = vmatpush1.msra.mxu0 0.0
  %607 = vmatprep.subr.mxu0 0.0
  %608 = vmatpush1.msra.mxu0 0.0
  %609 = vmatprep.subr.mxu0 0.0
  %610 = vmatpush1.msra.mxu0 0.0
  %611 = vmatprep.mubr.f32.mxu0 0.0
  %612 = vmatmul.mubr.f32.gmra.mrb[0].mxu0 %v545
  %v613 = vpop.f32.mrb[0].mxu0
  %v614 = vadd.f32 0.0, %v613
  %v615 = vpop.f32.mrb[0].mxu0
  %616 = vdwg.mxu0
  %v618 = vrot.slane %v614, 5
  %v620 = vadd.f32 %v295, %v618
  %v621 = vtanh.pop %v620
  %vm622 = vcmask 125955
  %623 = vst.msk [vmem:[#allocation2] sm:$0x8] %vm622, %v621
  %v625 = vrot.slane %v621, 3
  %v626 = vsel %vm126, %v625, 0
  %628 = vmatprep.subr.mxu0 0.0
  %629 = vmatpush1.msra.mxu0 %v303
  %630 = vmatprep.subr.mxu0 0.0
  %631 = vmatpush1.msra.mxu0 %v304
  %632 = vmatprep.subr.mxu0 0.0
  %633 = vmatpush1.msra.mxu0 0.0
  %634 = vmatprep.subr.mxu0 0.0
  %635 = vmatpush1.msra.mxu0 0.0
  %636 = vmatprep.subr.mxu0 0.0
  %637 = vmatpush1.msra.mxu0 0.0
  %638 = vmatprep.subr.mxu0 0.0
  %639 = vmatpush1.msra.mxu0 0.0
  %640 = vmatprep.subr.mxu0 0.0
  %641 = vmatpush1.msra.mxu0 0.0
  %642 = vmatprep.subr.mxu0 0.0
  %643 = vmatpush1.msra.mxu0 0.0
  %644 = vmatprep.subr.mxu0 0.0
  %645 = vmatpush1.msra.mxu0 0.0
  %646 = vmatprep.subr.mxu0 0.0
  %647 = vmatpush1.msra.mxu0 0.0
  %648 = vmatprep.subr.mxu0 0.0
  %649 = vmatpush1.msra.mxu0 0.0
  %650 = vmatprep.subr.mxu0 0.0
  %651 = vmatpush1.msra.mxu0 0.0
  %652 = vmatprep.subr.mxu0 0.0
  %653 = vmatpush1.msra.mxu0 0.0
  %654 = vmatprep.subr.mxu0 0.0
  %655 = vmatpush1.msra.mxu0 0.0
  %656 = vmatprep.subr.mxu0 0.0
  %657 = vmatpush1.msra.mxu0 0.0
  %658 = vmatprep.subr.mxu0 0.0
  %659 = vmatpush1.msra.mxu0 0.0
  %660 = vmatprep.subr.mxu0 0.0
  %661 = vmatpush1.msra.mxu0 0.0
  %662 = vmatprep.subr.mxu0 0.0
  %663 = vmatpush1.msra.mxu0 0.0
  %664 = vmatprep.subr.mxu0 0.0
  %665 = vmatpush1.msra.mxu0 0.0
  %666 = vmatprep.subr.mxu0 0.0
  %667 = vmatpush1.msra.mxu0 0.0
  %668 = vmatprep.subr.mxu0 0.0
  %669 = vmatpush1.msra.mxu0 0.0
  %670 = vmatprep.subr.mxu0 0.0
  %671 = vmatpush1.msra.mxu0 0.0
  %672 = vmatprep.subr.mxu0 0.0
  %673 = vmatpush1.msra.mxu0 0.0
  %674 = vmatprep.subr.mxu0 0.0
  %675 = vmatpush1.msra.mxu0 0.0
  %676 = vmatprep.subr.mxu0 0.0
  %677 = vmatpush1.msra.mxu0 0.0
  %678 = vmatprep.subr.mxu0 0.0
  %679 = vmatpush1.msra.mxu0 0.0
  %680 = vmatprep.subr.mxu0 0.0
  %681 = vmatpush1.msra.mxu0 0.0
  %682 = vmatprep.subr.mxu0 0.0
  %683 = vmatpush1.msra.mxu0 0.0
  %684 = vmatprep.subr.mxu0 0.0
  %685 = vmatpush1.msra.mxu0 0.0
  %686 = vmatprep.subr.mxu0 0.0
  %687 = vmatpush1.msra.mxu0 0.0
  %688 = vmatprep.subr.mxu0 0.0
  %689 = vmatpush1.msra.mxu0 0.0
  %690 = vmatprep.subr.mxu0 0.0
  %691 = vmatpush1.msra.mxu0 0.0
  %692 = vmatprep.mubr.f32.mxu0 0.0
  %693 = vmatmul.mubr.f32.gmra.mrb[0].mxu0 %v626
  %v694 = vpop.f32.mrb[0].mxu0
  %v695 = vadd.f32 0.0, %v694
  %v696 = vpop.f32.mrb[0].mxu0
  %697 = vdwg.mxu0
  %v699 = vrot.slane %v695, 4
  %v701 = vadd.f32 %v295, %v699
  %v702 = vtanh.pop %v701
  %vm703 = vcmask 126980
  %704 = vst.msk [vmem:[#allocation2] sm:$0x10] %vm703, %v702
  %v706 = vrot.slane %v702, 4
  %v707 = vsel %vm126, %v706, 0
  %709 = vmatprep.subr.mxu0 0.0
  %710 = vmatpush1.msra.mxu0 %v303
  %711 = vmatprep.subr.mxu0 0.0
  %712 = vmatpush1.msra.mxu0 %v304
  %713 = vmatprep.subr.mxu0 0.0
  %714 = vmatpush1.msra.mxu0 0.0
  %715 = vmatprep.subr.mxu0 0.0
  %716 = vmatpush1.msra.mxu0 0.0
  %717 = vmatprep.subr.mxu0 0.0
  %718 = vmatpush1.msra.mxu0 0.0
  %719 = vmatprep.subr.mxu0 0.0
  %720 = vmatpush1.msra.mxu0 0.0
  %721 = vmatprep.subr.mxu0 0.0
  %722 = vmatpush1.msra.mxu0 0.0
  %723 = vmatprep.subr.mxu0 0.0
  %724 = vmatpush1.msra.mxu0 0.0
  %725 = vmatprep.subr.mxu0 0.0
  %726 = vmatpush1.msra.mxu0 0.0
  %727 = vmatprep.subr.mxu0 0.0
  %728 = vmatpush1.msra.mxu0 0.0
  %729 = vmatprep.subr.mxu0 0.0
  %730 = vmatpush1.msra.mxu0 0.0
  %731 = vmatprep.subr.mxu0 0.0
  %732 = vmatpush1.msra.mxu0 0.0
  %733 = vmatprep.subr.mxu0 0.0
  %734 = vmatpush1.msra.mxu0 0.0
  %735 = vmatprep.subr.mxu0 0.0
  %736 = vmatpush1.msra.mxu0 0.0
  %737 = vmatprep.subr.mxu0 0.0
  %738 = vmatpush1.msra.mxu0 0.0
  %739 = vmatprep.subr.mxu0 0.0
  %740 = vmatpush1.msra.mxu0 0.0
  %741 = vmatprep.subr.mxu0 0.0
  %742 = vmatpush1.msra.mxu0 0.0
  %743 = vmatprep.subr.mxu0 0.0
  %744 = vmatpush1.msra.mxu0 0.0
  %745 = vmatprep.subr.mxu0 0.0
  %746 = vmatpush1.msra.mxu0 0.0
  %747 = vmatprep.subr.mxu0 0.0
  %748 = vmatpush1.msra.mxu0 0.0
  %749 = vmatprep.subr.mxu0 0.0
  %750 = vmatpush1.msra.mxu0 0.0
  %751 = vmatprep.subr.mxu0 0.0
  %752 = vmatpush1.msra.mxu0 0.0
  %753 = vmatprep.subr.mxu0 0.0
  %754 = vmatpush1.msra.mxu0 0.0
  %755 = vmatprep.subr.mxu0 0.0
  %756 = vmatpush1.msra.mxu0 0.0
  %757 = vmatprep.subr.mxu0 0.0
  %758 = vmatpush1.msra.mxu0 0.0
  %759 = vmatprep.subr.mxu0 0.0
  %760 = vmatpush1.msra.mxu0 0.0
  %761 = vmatprep.subr.mxu0 0.0
  %762 = vmatpush1.msra.mxu0 0.0
  %763 = vmatprep.subr.mxu0 0.0
  %764 = vmatpush1.msra.mxu0 0.0
  %765 = vmatprep.subr.mxu0 0.0
  %766 = vmatpush1.msra.mxu0 0.0
  %767 = vmatprep.subr.mxu0 0.0
  %768 = vmatpush1.msra.mxu0 0.0
  %769 = vmatprep.subr.mxu0 0.0
  %770 = vmatpush1.msra.mxu0 0.0
  %771 = vmatprep.subr.mxu0 0.0
  %772 = vmatpush1.msra.mxu0 0.0
  %773 = vmatprep.mubr.f32.mxu0 0.0
  %774 = vmatmul.mubr.f32.gmra.mrb[0].mxu0 %v707
  %v775 = vpop.f32.mrb[0].mxu0
  %v776 = vadd.f32 0.0, %v775
  %v777 = vpop.f32.mrb[0].mxu0
  %778 = vdwg.mxu0
  %v780 = vrot.slane %v776, 3
  %v782 = vadd.f32 %v295, %v780
  %v783 = vtanh.pop %v782
  %vm784 = vcmask 128005
  %785 = vst.msk [vmem:[#allocation2] sm:$0x20] %vm784, %v783
  %v787 = vrot.slane %v783, 5
  %v788 = vsel %vm126, %v787, 0
  %790 = vmatprep.subr.mxu0 0.0
  %791 = vmatpush1.msra.mxu0 %v303
  %792 = vmatprep.subr.mxu0 0.0
  %793 = vmatpush1.msra.mxu0 %v304
  %794 = vmatprep.subr.mxu0 0.0
  %795 = vmatpush1.msra.mxu0 0.0
  %796 = vmatprep.subr.mxu0 0.0
  %797 = vmatpush1.msra.mxu0 0.0
  %798 = vmatprep.subr.mxu0 0.0
  %799 = vmatpush1.msra.mxu0 0.0
  %800 = vmatprep.subr.mxu0 0.0
  %801 = vmatpush1.msra.mxu0 0.0
  %802 = vmatprep.subr.mxu0 0.0
  %803 = vmatpush1.msra.mxu0 0.0
  %804 = vmatprep.subr.mxu0 0.0
  %805 = vmatpush1.msra.mxu0 0.0
  %806 = vmatprep.subr.mxu0 0.0
  %807 = vmatpush1.msra.mxu0 0.0
  %808 = vmatprep.subr.mxu0 0.0
  %809 = vmatpush1.msra.mxu0 0.0
  %810 = vmatprep.subr.mxu0 0.0
  %811 = vmatpush1.msra.mxu0 0.0
  %812 = vmatprep.subr.mxu0 0.0
  %813 = vmatpush1.msra.mxu0 0.0
  %814 = vmatprep.subr.mxu0 0.0
  %815 = vmatpush1.msra.mxu0 0.0
  %816 = vmatprep.subr.mxu0 0.0
  %817 = vmatpush1.msra.mxu0 0.0
  %818 = vmatprep.subr.mxu0 0.0
  %819 = vmatpush1.msra.mxu0 0.0
  %820 = vmatprep.subr.mxu0 0.0
  %821 = vmatpush1.msra.mxu0 0.0
  %822 = vmatprep.subr.mxu0 0.0
  %823 = vmatpush1.msra.mxu0 0.0
  %824 = vmatprep.subr.mxu0 0.0
  %825 = vmatpush1.msra.mxu0 0.0
  %826 = vmatprep.subr.mxu0 0.0
  %827 = vmatpush1.msra.mxu0 0.0
  %828 = vmatprep.subr.mxu0 0.0
  %829 = vmatpush1.msra.mxu0 0.0
  %830 = vmatprep.subr.mxu0 0.0
  %831 = vmatpush1.msra.mxu0 0.0
  %832 = vmatprep.subr.mxu0 0.0
  %833 = vmatpush1.msra.mxu0 0.0
  %834 = vmatprep.subr.mxu0 0.0
  %835 = vmatpush1.msra.mxu0 0.0
  %836 = vmatprep.subr.mxu0 0.0
  %837 = vmatpush1.msra.mxu0 0.0
  %838 = vmatprep.subr.mxu0 0.0
  %839 = vmatpush1.msra.mxu0 0.0
  %840 = vmatprep.subr.mxu0 0.0
  %841 = vmatpush1.msra.mxu0 0.0
  %842 = vmatprep.subr.mxu0 0.0
  %843 = vmatpush1.msra.mxu0 0.0
  %844 = vmatprep.subr.mxu0 0.0
  %845 = vmatpush1.msra.mxu0 0.0
  %846 = vmatprep.subr.mxu0 0.0
  %847 = vmatpush1.msra.mxu0 0.0
  %848 = vmatprep.subr.mxu0 0.0
  %849 = vmatpush1.msra.mxu0 0.0
  %850 = vmatprep.subr.mxu0 0.0
  %851 = vmatpush1.msra.mxu0 0.0
  %852 = vmatprep.subr.mxu0 0.0
  %853 = vmatpush1.msra.mxu0 0.0
  %854 = vmatprep.mubr.f32.mxu0 0.0
  %855 = vmatmul.mubr.f32.gmra.mrb[0].mxu0 %v788
  %v856 = vpop.f32.mrb[0].mxu0
  %v857 = vadd.f32 0.0, %v856
  %v858 = vpop.f32.mrb[0].mxu0
  %859 = vdwg.mxu0
  %v861 = vrot.slane %v857, 2
  %v863 = vadd.f32 %v295, %v861
  %v864 = vtanh.pop %v863
  %vm865 = vcmask 129030
  %866 = vst.msk [vmem:[#allocation2] sm:$0x40] %vm865, %v864
  %v868 = vrot.slane %v864, 6
  %v869 = vsel %vm126, %v868, 0
  %871 = vmatprep.subr.mxu0 0.0
  %872 = vmatpush1.msra.mxu0 %v303
  %873 = vmatprep.subr.mxu0 0.0
  %874 = vmatpush1.msra.mxu0 %v304
  %875 = vmatprep.subr.mxu0 0.0
  %876 = vmatpush1.msra.mxu0 0.0
  %877 = vmatprep.subr.mxu0 0.0
  %878 = vmatpush1.msra.mxu0 0.0
  %879 = vmatprep.subr.mxu0 0.0
  %880 = vmatpush1.msra.mxu0 0.0
  %881 = vmatprep.subr.mxu0 0.0
  %882 = vmatpush1.msra.mxu0 0.0
  %883 = vmatprep.subr.mxu0 0.0
  %884 = vmatpush1.msra.mxu0 0.0
  %885 = vmatprep.subr.mxu0 0.0
  %886 = vmatpush1.msra.mxu0 0.0
  %887 = vmatprep.subr.mxu0 0.0
  %888 = vmatpush1.msra.mxu0 0.0
  %889 = vmatprep.subr.mxu0 0.0
  %890 = vmatpush1.msra.mxu0 0.0
  %891 = vmatprep.subr.mxu0 0.0
  %892 = vmatpush1.msra.mxu0 0.0
  %893 = vmatprep.subr.mxu0 0.0
  %894 = vmatpush1.msra.mxu0 0.0
  %895 = vmatprep.subr.mxu0 0.0
  %896 = vmatpush1.msra.mxu0 0.0
  %897 = vmatprep.subr.mxu0 0.0
  %898 = vmatpush1.msra.mxu0 0.0
  %899 = vmatprep.subr.mxu0 0.0
  %900 = vmatpush1.msra.mxu0 0.0
  %901 = vmatprep.subr.mxu0 0.0
  %902 = vmatpush1.msra.mxu0 0.0
  %903 = vmatprep.subr.mxu0 0.0
  %904 = vmatpush1.msra.mxu0 0.0
  %905 = vmatprep.subr.mxu0 0.0
  %906 = vmatpush1.msra.mxu0 0.0
  %907 = vmatprep.subr.mxu0 0.0
  %908 = vmatpush1.msra.mxu0 0.0
  %909 = vmatprep.subr.mxu0 0.0
  %910 = vmatpush1.msra.mxu0 0.0
  %911 = vmatprep.subr.mxu0 0.0
  %912 = vmatpush1.msra.mxu0 0.0
  %913 = vmatprep.subr.mxu0 0.0
  %914 = vmatpush1.msra.mxu0 0.0
  %915 = vmatprep.subr.mxu0 0.0
  %916 = vmatpush1.msra.mxu0 0.0
  %917 = vmatprep.subr.mxu0 0.0
  %918 = vmatpush1.msra.mxu0 0.0
  %919 = vmatprep.subr.mxu0 0.0
  %920 = vmatpush1.msra.mxu0 0.0
  %921 = vmatprep.subr.mxu0 0.0
  %922 = vmatpush1.msra.mxu0 0.0
  %923 = vmatprep.subr.mxu0 0.0
  %924 = vmatpush1.msra.mxu0 0.0
  %925 = vmatprep.subr.mxu0 0.0
  %926 = vmatpush1.msra.mxu0 0.0
  %927 = vmatprep.subr.mxu0 0.0
  %928 = vmatpush1.msra.mxu0 0.0
  %929 = vmatprep.subr.mxu0 0.0
  %930 = vmatpush1.msra.mxu0 0.0
  %931 = vmatprep.subr.mxu0 0.0
  %932 = vmatpush1.msra.mxu0 0.0
  %933 = vmatprep.subr.mxu0 0.0
  %934 = vmatpush1.msra.mxu0 0.0
  %935 = vmatprep.mubr.f32.mxu0 0.0
  %936 = vmatmul.mubr.f32.gmra.mrb[0].mxu0 %v869
  %v937 = vpop.f32.mrb[0].mxu0
  %v938 = vadd.f32 0.0, %v937
  %v939 = vpop.f32.mrb[0].mxu0
  %940 = vdwg.mxu0
  %v942 = vrot.slane %v938, 1
  %v944 = vadd.f32 %v295, %v942
  %v945 = vtanh.pop %v944
  %vm946 = vcmask 130055
  %947 = vst.msk [vmem:[#allocation2] sm:$0x80] %vm946, %v945
  %v949 = vrot.slane %v945, 7
  %v950 = vsel %vm126, %v949, 0
  %952 = vmatprep.subr.mxu0 0.0
  %953 = vmatpush1.msra.mxu0 %v303
  %954 = vmatprep.subr.mxu0 0.0
  %955 = vmatpush1.msra.mxu0 %v304
  %956 = vmatprep.subr.mxu0 0.0
  %957 = vmatpush1.msra.mxu0 0.0
  %958 = vmatprep.subr.mxu0 0.0
  %959 = vmatpush1.msra.mxu0 0.0
  %960 = vmatprep.subr.mxu0 0.0
  %961 = vmatpush1.msra.mxu0 0.0
  %962 = vmatprep.subr.mxu0 0.0
  %963 = vmatpush1.msra.mxu0 0.0
  %964 = vmatprep.subr.mxu0 0.0
  %965 = vmatpush1.msra.mxu0 0.0
  %966 = vmatprep.subr.mxu0 0.0
  %967 = vmatpush1.msra.mxu0 0.0
  %968 = vmatprep.subr.mxu0 0.0
  %969 = vmatpush1.msra.mxu0 0.0
  %970 = vmatprep.subr.mxu0 0.0
  %971 = vmatpush1.msra.mxu0 0.0
  %972 = vmatprep.subr.mxu0 0.0
  %973 = vmatpush1.msra.mxu0 0.0
  %974 = vmatprep.subr.mxu0 0.0
  %975 = vmatpush1.msra.mxu0 0.0
  %976 = vmatprep.subr.mxu0 0.0
  %977 = vmatpush1.msra.mxu0 0.0
  %978 = vmatprep.subr.mxu0 0.0
  %979 = vmatpush1.msra.mxu0 0.0
  %980 = vmatprep.subr.mxu0 0.0
  %981 = vmatpush1.msra.mxu0 0.0
  %982 = vmatprep.subr.mxu0 0.0
  %983 = vmatpush1.msra.mxu0 0.0
  %984 = vmatprep.subr.mxu0 0.0
  %985 = vmatpush1.msra.mxu0 0.0
  %986 = vmatprep.subr.mxu0 0.0
  %987 = vmatpush1.msra.mxu0 0.0
  %988 = vmatprep.subr.mxu0 0.0
  %989 = vmatpush1.msra.mxu0 0.0
  %990 = vmatprep.subr.mxu0 0.0
  %991 = vmatpush1.msra.mxu0 0.0
  %992 = vmatprep.subr.mxu0 0.0
  %993 = vmatpush1.msra.mxu0 0.0
  %994 = vmatprep.subr.mxu0 0.0
  %995 = vmatpush1.msra.mxu0 0.0
  %996 = vmatprep.subr.mxu0 0.0
  %997 = vmatpush1.msra.mxu0 0.0
  %998 = vmatprep.subr.mxu0 0.0
  %999 = vmatpush1.msra.mxu0 0.0
  %1000 = vmatprep.subr.mxu0 0.0
  %1001 = vmatpush1.msra.mxu0 0.0
  %1002 = vmatprep.subr.mxu0 0.0
  %1003 = vmatpush1.msra.mxu0 0.0
  %1004 = vmatprep.subr.mxu0 0.0
  %1005 = vmatpush1.msra.mxu0 0.0
  %1006 = vmatprep.subr.mxu0 0.0
  %1007 = vmatpush1.msra.mxu0 0.0
  %1008 = vmatprep.subr.mxu0 0.0
  %1009 = vmatpush1.msra.mxu0 0.0
  %1010 = vmatprep.subr.mxu0 0.0
  %1011 = vmatpush1.msra.mxu0 0.0
  %1012 = vmatprep.subr.mxu0 0.0
  %1013 = vmatpush1.msra.mxu0 0.0
  %1014 = vmatprep.subr.mxu0 0.0
  %1015 = vmatpush1.msra.mxu0 0.0
  %1016 = vmatprep.mubr.f32.mxu0 0.0
  %1017 = vmatmul.mubr.f32.gmra.mrb[0].mxu0 %v950
  %v1018 = vpop.f32.mrb[0].mxu0
  %v1019 = vadd.f32 0.0, %v1018
  %v1020 = vpop.f32.mrb[0].mxu0
  %1021 = vdwg.mxu0
  %v1022 = vadd.f32 %v300, %v1019
  %v1023 = vtanh.pop %v1022
  %1024 = vst.msk [vmem:[#allocation2 + $0x8] sm:$0x1] %vm380, %v1023
  %v1026 = vsel %vm126, %v1023, 0
  %1028 = vmatprep.subr.mxu0 0.0
  %1029 = vmatpush1.msra.mxu0 %v303
  %1030 = vmatprep.subr.mxu0 0.0
  %1031 = vmatpush1.msra.mxu0 %v304
  %1032 = vmatprep.subr.mxu0 0.0
  %1033 = vmatpush1.msra.mxu0 0.0
  %1034 = vmatprep.subr.mxu0 0.0
  %1035 = vmatpush1.msra.mxu0 0.0
  %1036 = vmatprep.subr.mxu0 0.0
  %1037 = vmatpush1.msra.mxu0 0.0
  %1038 = vmatprep.subr.mxu0 0.0
  %1039 = vmatpush1.msra.mxu0 0.0
  %1040 = vmatprep.subr.mxu0 0.0
  %1041 = vmatpush1.msra.mxu0 0.0
  %1042 = vmatprep.subr.mxu0 0.0
  %1043 = vmatpush1.msra.mxu0 0.0
  %1044 = vmatprep.subr.mxu0 0.0
  %1045 = vmatpush1.msra.mxu0 0.0
  %1046 = vmatprep.subr.mxu0 0.0
  %1047 = vmatpush1.msra.mxu0 0.0
  %1048 = vmatprep.subr.mxu0 0.0
  %1049 = vmatpush1.msra.mxu0 0.0
  %1050 = vmatprep.subr.mxu0 0.0
  %1051 = vmatpush1.msra.mxu0 0.0
  %1052 = vmatprep.subr.mxu0 0.0
  %1053 = vmatpush1.msra.mxu0 0.0
  %1054 = vmatprep.subr.mxu0 0.0
  %1055 = vmatpush1.msra.mxu0 0.0
  %1056 = vmatprep.subr.mxu0 0.0
  %1057 = vmatpush1.msra.mxu0 0.0
  %1058 = vmatprep.subr.mxu0 0.0
  %1059 = vmatpush1.msra.mxu0 0.0
  %1060 = vmatprep.subr.mxu0 0.0
  %1061 = vmatpush1.msra.mxu0 0.0
  %1062 = vmatprep.subr.mxu0 0.0
  %1063 = vmatpush1.msra.mxu0 0.0
  %1064 = vmatprep.subr.mxu0 0.0
  %1065 = vmatpush1.msra.mxu0 0.0
  %1066 = vmatprep.subr.mxu0 0.0
  %1067 = vmatpush1.msra.mxu0 0.0
  %1068 = vmatprep.subr.mxu0 0.0
  %1069 = vmatpush1.msra.mxu0 0.0
  %1070 = vmatprep.subr.mxu0 0.0
  %1071 = vmatpush1.msra.mxu0 0.0
  %1072 = vmatprep.subr.mxu0 0.0
  %1073 = vmatpush1.msra.mxu0 0.0
  %1074 = vmatprep.subr.mxu0 0.0
  %1075 = vmatpush1.msra.mxu0 0.0
  %1076 = vmatprep.subr.mxu0 0.0
  %1077 = vmatpush1.msra.mxu0 0.0
  %1078 = vmatprep.subr.mxu0 0.0
  %1079 = vmatpush1.msra.mxu0 0.0
  %1080 = vmatprep.subr.mxu0 0.0
  %1081 = vmatpush1.msra.mxu0 0.0
  %1082 = vmatprep.subr.mxu0 0.0
  %1083 = vmatpush1.msra.mxu0 0.0
  %1084 = vmatprep.subr.mxu0 0.0
  %1085 = vmatpush1.msra.mxu0 0.0
  %1086 = vmatprep.subr.mxu0 0.0
  %1087 = vmatpush1.msra.mxu0 0.0
  %1088 = vmatprep.subr.mxu0 0.0
  %1089 = vmatpush1.msra.mxu0 0.0
  %1090 = vmatprep.subr.mxu0 0.0
  %1091 = vmatpush1.msra.mxu0 0.0
  %1092 = vmatprep.mubr.f32.mxu0 0.0
  %1093 = vmatmul.mubr.f32.gmra.mrb[0].mxu0 %v1026
  %v1094 = vpop.f32.mrb[0].mxu0
  %v1095 = vadd.f32 0.0, %v1094
  %v1096 = vpop.f32.mrb[0].mxu0
  %1097 = vdwg.mxu0
  %v1099 = vrot.slane %v1095, 7
  %v1101 = vadd.f32 %v300, %v1099
  %v1102 = vtanh.pop %v1101
  %1103 = vst.msk [vmem:[#allocation2 + $0x8] sm:$0x2] %vm460, %v1102
  %v1105 = vrot.slane %v1102, 1
  %v1106 = vsel %vm126, %v1105, 0
  %1108 = vmatprep.subr.mxu0 0.0
  %1109 = vmatpush1.msra.mxu0 %v303
  %1110 = vmatprep.subr.mxu0 0.0
  %1111 = vmatpush1.msra.mxu0 %v304
  %1112 = vmatprep.subr.mxu0 0.0
  %1113 = vmatpush1.msra.mxu0 0.0
  %1114 = vmatprep.subr.mxu0 0.0
  %1115 = vmatpush1.msra.mxu0 0.0
  %1116 = vmatprep.subr.mxu0 0.0
  %1117 = vmatpush1.msra.mxu0 0.0
  %1118 = vmatprep.subr.mxu0 0.0
  %1119 = vmatpush1.msra.mxu0 0.0
  %1120 = vmatprep.subr.mxu0 0.0
  %1121 = vmatpush1.msra.mxu0 0.0
  %1122 = vmatprep.subr.mxu0 0.0
  %1123 = vmatpush1.msra.mxu0 0.0
  %1124 = vmatprep.subr.mxu0 0.0
  %1125 = vmatpush1.msra.mxu0 0.0
  %1126 = vmatprep.subr.mxu0 0.0
  %1127 = vmatpush1.msra.mxu0 0.0
  %1128 = vmatprep.subr.mxu0 0.0
  %1129 = vmatpush1.msra.mxu0 0.0
  %1130 = vmatprep.subr.mxu0 0.0
  %1131 = vmatpush1.msra.mxu0 0.0
  %1132 = vmatprep.subr.mxu0 0.0
  %1133 = vmatpush1.msra.mxu0 0.0
  %1134 = vmatprep.subr.mxu0 0.0
  %1135 = vmatpush1.msra.mxu0 0.0
  %1136 = vmatprep.subr.mxu0 0.0
  %1137 = vmatpush1.msra.mxu0 0.0
  %1138 = vmatprep.subr.mxu0 0.0
  %1139 = vmatpush1.msra.mxu0 0.0
  %1140 = vmatprep.subr.mxu0 0.0
  %1141 = vmatpush1.msra.mxu0 0.0
  %1142 = vmatprep.subr.mxu0 0.0
  %1143 = vmatpush1.msra.mxu0 0.0
  %1144 = vmatprep.subr.mxu0 0.0
  %1145 = vmatpush1.msra.mxu0 0.0
  %1146 = vmatprep.subr.mxu0 0.0
  %1147 = vmatpush1.msra.mxu0 0.0
  %1148 = vmatprep.subr.mxu0 0.0
  %1149 = vmatpush1.msra.mxu0 0.0
  %1150 = vmatprep.subr.mxu0 0.0
  %1151 = vmatpush1.msra.mxu0 0.0
  %1152 = vmatprep.subr.mxu0 0.0
  %1153 = vmatpush1.msra.mxu0 0.0
  %1154 = vmatprep.subr.mxu0 0.0
  %1155 = vmatpush1.msra.mxu0 0.0
  %1156 = vmatprep.subr.mxu0 0.0
  %1157 = vmatpush1.msra.mxu0 0.0
  %1158 = vmatprep.subr.mxu0 0.0
  %1159 = vmatpush1.msra.mxu0 0.0
  %1160 = vmatprep.subr.mxu0 0.0
  %1161 = vmatpush1.msra.mxu0 0.0
  %1162 = vmatprep.subr.mxu0 0.0
  %1163 = vmatpush1.msra.mxu0 0.0
  %1164 = vmatprep.subr.mxu0 0.0
  %1165 = vmatpush1.msra.mxu0 0.0
  %1166 = vmatprep.subr.mxu0 0.0
  %1167 = vmatpush1.msra.mxu0 0.0
  %1168 = vmatprep.subr.mxu0 0.0
  %1169 = vmatpush1.msra.mxu0 0.0
  %1170 = vmatprep.subr.mxu0 0.0
  %1171 = vmatpush1.msra.mxu0 0.0
  %1172 = vmatprep.mubr.f32.mxu0 0.0
  %1173 = vmatmul.mubr.f32.gmra.mrb[0].mxu0 %v1106
  %v1174 = vpop.f32.mrb[0].mxu0
  %v1175 = vadd.f32 0.0, %v1174
  %v1176 = vpop.f32.mrb[0].mxu0
  %1177 = vdwg.mxu0
  %v1179 = vrot.slane %v1175, 6
  %v1181 = vadd.f32 %v300, %v1179
  %v1182 = vtanh.pop %v1181
  %1183 = vst.msk [vmem:[#allocation2 + $0x8] sm:$0x4] %vm541, %v1182
  %v1185 = vrot.slane %v1182, 2
  %v1186 = vsel %vm126, %v1185, 0
  %1188 = vmatprep.subr.mxu0 0.0
  %1189 = vmatpush1.msra.mxu0 %v303
  %1190 = vmatprep.subr.mxu0 0.0
  %1191 = vmatpush1.msra.mxu0 %v304
  %1192 = vmatprep.subr.mxu0 0.0
  %1193 = vmatpush1.msra.mxu0 0.0
  %1194 = vmatprep.subr.mxu0 0.0
  %1195 = vmatpush1.msra.mxu0 0.0
  %1196 = vmatprep.subr.mxu0 0.0
  %1197 = vmatpush1.msra.mxu0 0.0
  %1198 = vmatprep.subr.mxu0 0.0
  %1199 = vmatpush1.msra.mxu0 0.0
  %1200 = vmatprep.subr.mxu0 0.0
  %1201 = vmatpush1.msra.mxu0 0.0
  %1202 = vmatprep.subr.mxu0 0.0
  %1203 = vmatpush1.msra.mxu0 0.0
  %1204 = vmatprep.subr.mxu0 0.0
  %1205 = vmatpush1.msra.mxu0 0.0
  %1206 = vmatprep.subr.mxu0 0.0
  %1207 = vmatpush1.msra.mxu0 0.0
  %1208 = vmatprep.subr.mxu0 0.0
  %1209 = vmatpush1.msra.mxu0 0.0
  %1210 = vmatprep.subr.mxu0 0.0
  %1211 = vmatpush1.msra.mxu0 0.0
  %1212 = vmatprep.subr.mxu0 0.0
  %1213 = vmatpush1.msra.mxu0 0.0
  %1214 = vmatprep.subr.mxu0 0.0
  %1215 = vmatpush1.msra.mxu0 0.0
  %1216 = vmatprep.subr.mxu0 0.0
  %1217 = vmatpush1.msra.mxu0 0.0
  %1218 = vmatprep.subr.mxu0 0.0
  %1219 = vmatpush1.msra.mxu0 0.0
  %1220 = vmatprep.subr.mxu0 0.0
  %1221 = vmatpush1.msra.mxu0 0.0
  %1222 = vmatprep.subr.mxu0 0.0
  %1223 = vmatpush1.msra.mxu0 0.0
  %1224 = vmatprep.subr.mxu0 0.0
  %1225 = vmatpush1.msra.mxu0 0.0
  %1226 = vmatprep.subr.mxu0 0.0
  %1227 = vmatpush1.msra.mxu0 0.0
  %1228 = vmatprep.subr.mxu0 0.0
  %1229 = vmatpush1.msra.mxu0 0.0
  %1230 = vmatprep.subr.mxu0 0.0
  %1231 = vmatpush1.msra.mxu0 0.0
  %1232 = vmatprep.subr.mxu0 0.0
  %1233 = vmatpush1.msra.mxu0 0.0
  %1234 = vmatprep.subr.mxu0 0.0
  %1235 = vmatpush1.msra.mxu0 0.0
  %1236 = vmatprep.subr.mxu0 0.0
  %1237 = vmatpush1.msra.mxu0 0.0
  %1238 = vmatprep.subr.mxu0 0.0
  %1239 = vmatpush1.msra.mxu0 0.0
  %1240 = vmatprep.subr.mxu0 0.0
  %1241 = vmatpush1.msra.mxu0 0.0
  %1242 = vmatprep.subr.mxu0 0.0
  %1243 = vmatpush1.msra.mxu0 0.0
  %1244 = vmatprep.subr.mxu0 0.0
  %1245 = vmatpush1.msra.mxu0 0.0
  %1246 = vmatprep.subr.mxu0 0.0
  %1247 = vmatpush1.msra.mxu0 0.0
  %1248 = vmatprep.subr.mxu0 0.0
  %1249 = vmatpush1.msra.mxu0 0.0
  %1250 = vmatprep.subr.mxu0 0.0
  %1251 = vmatpush1.msra.mxu0 0.0
  %1252 = vmatprep.mubr.f32.mxu0 0.0
  %1253 = vmatmul.mubr.f32.gmra.mrb[0].mxu0 %v1186
  %v1254 = vpop.f32.mrb[0].mxu0
  %v1255 = vadd.f32 0.0, %v1254
  %v1256 = vpop.f32.mrb[0].mxu0
  %1257 = vdwg.mxu0
  %v1259 = vrot.slane %v1255, 5
  %v1261 = vadd.f32 %v300, %v1259
  %v1262 = vtanh.pop %v1261
  %1263 = vst.msk [vmem:[#allocation2 + $0x8] sm:$0x8] %vm622, %v1262
  %v1265 = vrot.slane %v1262, 3
  %v1266 = vsel %vm126, %v1265, 0
  %1268 = vmatprep.subr.mxu0 0.0
  %1269 = vmatpush1.msra.mxu0 %v303
  %1270 = vmatprep.subr.mxu0 0.0
  %1271 = vmatpush1.msra.mxu0 %v304
  %1272 = vmatprep.subr.mxu0 0.0
  %1273 = vmatpush1.msra.mxu0 0.0
  %1274 = vmatprep.subr.mxu0 0.0
  %1275 = vmatpush1.msra.mxu0 0.0
  %1276 = vmatprep.subr.mxu0 0.0
  %1277 = vmatpush1.msra.mxu0 0.0
  %1278 = vmatprep.subr.mxu0 0.0
  %1279 = vmatpush1.msra.mxu0 0.0
  %1280 = vmatprep.subr.mxu0 0.0
  %1281 = vmatpush1.msra.mxu0 0.0
  %1282 = vmatprep.subr.mxu0 0.0
  %1283 = vmatpush1.msra.mxu0 0.0
  %1284 = vmatprep.subr.mxu0 0.0
  %1285 = vmatpush1.msra.mxu0 0.0
  %1286 = vmatprep.subr.mxu0 0.0
  %1287 = vmatpush1.msra.mxu0 0.0
  %1288 = vmatprep.subr.mxu0 0.0
  %1289 = vmatpush1.msra.mxu0 0.0
  %1290 = vmatprep.subr.mxu0 0.0
  %1291 = vmatpush1.msra.mxu0 0.0
  %1292 = vmatprep.subr.mxu0 0.0
  %1293 = vmatpush1.msra.mxu0 0.0
  %1294 = vmatprep.subr.mxu0 0.0
  %1295 = vmatpush1.msra.mxu0 0.0
  %1296 = vmatprep.subr.mxu0 0.0
  %1297 = vmatpush1.msra.mxu0 0.0
  %1298 = vmatprep.subr.mxu0 0.0
  %1299 = vmatpush1.msra.mxu0 0.0
  %1300 = vmatprep.subr.mxu0 0.0
  %1301 = vmatpush1.msra.mxu0 0.0
  %1302 = vmatprep.subr.mxu0 0.0
  %1303 = vmatpush1.msra.mxu0 0.0
  %1304 = vmatprep.subr.mxu0 0.0
  %1305 = vmatpush1.msra.mxu0 0.0
  %1306 = vmatprep.subr.mxu0 0.0
  %1307 = vmatpush1.msra.mxu0 0.0
  %1308 = vmatprep.subr.mxu0 0.0
  %1309 = vmatpush1.msra.mxu0 0.0
  %1310 = vmatprep.subr.mxu0 0.0
  %1311 = vmatpush1.msra.mxu0 0.0
  %1312 = vmatprep.subr.mxu0 0.0
  %1313 = vmatpush1.msra.mxu0 0.0
  %1314 = vmatprep.subr.mxu0 0.0
  %1315 = vmatpush1.msra.mxu0 0.0
  %1316 = vmatprep.subr.mxu0 0.0
  %1317 = vmatpush1.msra.mxu0 0.0
  %1318 = vmatprep.subr.mxu0 0.0
  %1319 = vmatpush1.msra.mxu0 0.0
  %1320 = vmatprep.subr.mxu0 0.0
  %1321 = vmatpush1.msra.mxu0 0.0
  %1322 = vmatprep.subr.mxu0 0.0
  %1323 = vmatpush1.msra.mxu0 0.0
  %1324 = vmatprep.subr.mxu0 0.0
  %1325 = vmatpush1.msra.mxu0 0.0
  %1326 = vmatprep.subr.mxu0 0.0
  %1327 = vmatpush1.msra.mxu0 0.0
  %1328 = vmatprep.subr.mxu0 0.0
  %1329 = vmatpush1.msra.mxu0 0.0
  %1330 = vmatprep.subr.mxu0 0.0
  %1331 = vmatpush1.msra.mxu0 0.0
  %1332 = vmatprep.mubr.f32.mxu0 0.0
  %1333 = vmatmul.mubr.f32.gmra.mrb[0].mxu0 %v1266
  %v1334 = vpop.f32.mrb[0].mxu0
  %v1335 = vadd.f32 0.0, %v1334
  %v1336 = vpop.f32.mrb[0].mxu0
  %1337 = vdwg.mxu0
  %v1339 = vrot.slane %v1335, 4
  %v1341 = vadd.f32 %v300, %v1339
  %v1342 = vtanh.pop %v1341
  %1343 = vst.msk [vmem:[#allocation2 + $0x8] sm:$0x10] %vm703, %v1342
  %v1345 = vrot.slane %v1342, 4
  %v1346 = vsel %vm126, %v1345, 0
  %1348 = vmatprep.subr.mxu0 0.0
  %1349 = vmatpush1.msra.mxu0 %v303
  %1350 = vmatprep.subr.mxu0 0.0
  %1351 = vmatpush1.msra.mxu0 %v304
  %1352 = vmatprep.subr.mxu0 0.0
  %1353 = vmatpush1.msra.mxu0 0.0
  %1354 = vmatprep.subr.mxu0 0.0
  %1355 = vmatpush1.msra.mxu0 0.0
  %1356 = vmatprep.subr.mxu0 0.0
  %1357 = vmatpush1.msra.mxu0 0.0
  %1358 = vmatprep.subr.mxu0 0.0
  %1359 = vmatpush1.msra.mxu0 0.0
  %1360 = vmatprep.subr.mxu0 0.0
  %1361 = vmatpush1.msra.mxu0 0.0
  %1362 = vmatprep.subr.mxu0 0.0
  %1363 = vmatpush1.msra.mxu0 0.0
  %1364 = vmatprep.subr.mxu0 0.0
  %1365 = vmatpush1.msra.mxu0 0.0
  %1366 = vmatprep.subr.mxu0 0.0
  %1367 = vmatpush1.msra.mxu0 0.0
  %1368 = vmatprep.subr.mxu0 0.0
  %1369 = vmatpush1.msra.mxu0 0.0
  %1370 = vmatprep.subr.mxu0 0.0
  %1371 = vmatpush1.msra.mxu0 0.0
  %1372 = vmatprep.subr.mxu0 0.0
  %1373 = vmatpush1.msra.mxu0 0.0
  %1374 = vmatprep.subr.mxu0 0.0
  %1375 = vmatpush1.msra.mxu0 0.0
  %1376 = vmatprep.subr.mxu0 0.0
  %1377 = vmatpush1.msra.mxu0 0.0
  %1378 = vmatprep.subr.mxu0 0.0
  %1379 = vmatpush1.msra.mxu0 0.0
  %1380 = vmatprep.subr.mxu0 0.0
  %1381 = vmatpush1.msra.mxu0 0.0
  %1382 = vmatprep.subr.mxu0 0.0
  %1383 = vmatpush1.msra.mxu0 0.0
  %1384 = vmatprep.subr.mxu0 0.0
  %1385 = vmatpush1.msra.mxu0 0.0
  %1386 = vmatprep.subr.mxu0 0.0
  %1387 = vmatpush1.msra.mxu0 0.0
  %1388 = vmatprep.subr.mxu0 0.0
  %1389 = vmatpush1.msra.mxu0 0.0
  %1390 = vmatprep.subr.mxu0 0.0
  %1391 = vmatpush1.msra.mxu0 0.0
  %1392 = vmatprep.subr.mxu0 0.0
  %1393 = vmatpush1.msra.mxu0 0.0
  %1394 = vmatprep.subr.mxu0 0.0
  %1395 = vmatpush1.msra.mxu0 0.0
  %1396 = vmatprep.subr.mxu0 0.0
  %1397 = vmatpush1.msra.mxu0 0.0
  %1398 = vmatprep.subr.mxu0 0.0
  %1399 = vmatpush1.msra.mxu0 0.0
  %1400 = vmatprep.subr.mxu0 0.0
  %1401 = vmatpush1.msra.mxu0 0.0
  %1402 = vmatprep.subr.mxu0 0.0
  %1403 = vmatpush1.msra.mxu0 0.0
  %1404 = vmatprep.subr.mxu0 0.0
  %1405 = vmatpush1.msra.mxu0 0.0
  %1406 = vmatprep.subr.mxu0 0.0
  %1407 = vmatpush1.msra.mxu0 0.0
  %1408 = vmatprep.subr.mxu0 0.0
  %1409 = vmatpush1.msra.mxu0 0.0
  %1410 = vmatprep.subr.mxu0 0.0
  %1411 = vmatpush1.msra.mxu0 0.0
  %1412 = vmatprep.mubr.f32.mxu0 0.0
  %1413 = vmatmul.mubr.f32.gmra.mrb[0].mxu0 %v1346
  %v1414 = vpop.f32.mrb[0].mxu0
  %v1415 = vadd.f32 0.0, %v1414
  %v1416 = vpop.f32.mrb[0].mxu0
  %1417 = vdwg.mxu0
  %v1419 = vrot.slane %v1415, 3
  %v1421 = vadd.f32 %v300, %v1419
  %v1422 = vtanh.pop %v1421
  %1423 = vst.msk [vmem:[#allocation2 + $0x8] sm:$0x20] %vm784, %v1422
  %v1425 = vrot.slane %v1422, 5
  %v1426 = vsel %vm126, %v1425, 0
  %1428 = vmatprep.subr.mxu0 0.0
  %1429 = vmatpush1.msra.mxu0 %v303
  %1430 = vmatprep.subr.mxu0 0.0
  %1431 = vmatpush1.msra.mxu0 %v304
  %1432 = vmatprep.subr.mxu0 0.0
  %1433 = vmatpush1.msra.mxu0 0.0
  %1434 = vmatprep.subr.mxu0 0.0
  %1435 = vmatpush1.msra.mxu0 0.0
  %1436 = vmatprep.subr.mxu0 0.0
  %1437 = vmatpush1.msra.mxu0 0.0
  %1438 = vmatprep.subr.mxu0 0.0
  %1439 = vmatpush1.msra.mxu0 0.0
  %1440 = vmatprep.subr.mxu0 0.0
  %1441 = vmatpush1.msra.mxu0 0.0
  %1442 = vmatprep.subr.mxu0 0.0
  %1443 = vmatpush1.msra.mxu0 0.0
  %1444 = vmatprep.subr.mxu0 0.0
  %1445 = vmatpush1.msra.mxu0 0.0
  %1446 = vmatprep.subr.mxu0 0.0
  %1447 = vmatpush1.msra.mxu0 0.0
  %1448 = vmatprep.subr.mxu0 0.0
  %1449 = vmatpush1.msra.mxu0 0.0
  %1450 = vmatprep.subr.mxu0 0.0
  %1451 = vmatpush1.msra.mxu0 0.0
  %1452 = vmatprep.subr.mxu0 0.0
  %1453 = vmatpush1.msra.mxu0 0.0
  %1454 = vmatprep.subr.mxu0 0.0
  %1455 = vmatpush1.msra.mxu0 0.0
  %1456 = vmatprep.subr.mxu0 0.0
  %1457 = vmatpush1.msra.mxu0 0.0
  %1458 = vmatprep.subr.mxu0 0.0
  %1459 = vmatpush1.msra.mxu0 0.0
  %1460 = vmatprep.subr.mxu0 0.0
  %1461 = vmatpush1.msra.mxu0 0.0
  %1462 = vmatprep.subr.mxu0 0.0
  %1463 = vmatpush1.msra.mxu0 0.0
  %1464 = vmatprep.subr.mxu0 0.0
  %1465 = vmatpush1.msra.mxu0 0.0
  %1466 = vmatprep.subr.mxu0 0.0
  %1467 = vmatpush1.msra.mxu0 0.0
  %1468 = vmatprep.subr.mxu0 0.0
  %1469 = vmatpush1.msra.mxu0 0.0
  %1470 = vmatprep.subr.mxu0 0.0
  %1471 = vmatpush1.msra.mxu0 0.0
  %1472 = vmatprep.subr.mxu0 0.0
  %1473 = vmatpush1.msra.mxu0 0.0
  %1474 = vmatprep.subr.mxu0 0.0
  %1475 = vmatpush1.msra.mxu0 0.0
  %1476 = vmatprep.subr.mxu0 0.0
  %1477 = vmatpush1.msra.mxu0 0.0
  %1478 = vmatprep.subr.mxu0 0.0
  %1479 = vmatpush1.msra.mxu0 0.0
  %1480 = vmatprep.subr.mxu0 0.0
  %1481 = vmatpush1.msra.mxu0 0.0
  %1482 = vmatprep.subr.mxu0 0.0
  %1483 = vmatpush1.msra.mxu0 0.0
  %1484 = vmatprep.subr.mxu0 0.0
  %1485 = vmatpush1.msra.mxu0 0.0
  %1486 = vmatprep.subr.mxu0 0.0
  %1487 = vmatpush1.msra.mxu0 0.0
  %1488 = vmatprep.subr.mxu0 0.0
  %1489 = vmatpush1.msra.mxu0 0.0
  %1490 = vmatprep.subr.mxu0 0.0
  %1491 = vmatpush1.msra.mxu0 0.0
  %1492 = vmatprep.mubr.f32.mxu0 0.0
  %1493 = vmatmul.mubr.f32.gmra.mrb[0].mxu0 %v1426
  %v1494 = vpop.f32.mrb[0].mxu0
  %v1495 = vadd.f32 0.0, %v1494
  %v1496 = vpop.f32.mrb[0].mxu0
  %1497 = vdwg.mxu0
  %v1499 = vrot.slane %v1495, 2
  %v1501 = vadd.f32 %v300, %v1499
  %v1502 = vtanh.pop %v1501
  %1503 = vst.msk [vmem:[#allocation2 + $0x8] sm:$0x40] %vm865, %v1502
  %v1505 = vrot.slane %v1502, 6
  %v1506 = vsel %vm126, %v1505, 0
  %1508 = vmatprep.subr.mxu0 0.0
  %1509 = vmatpush1.msra.mxu0 %v303
  %1510 = vmatprep.subr.mxu0 0.0
  %1511 = vmatpush1.msra.mxu0 %v304
  %1512 = vmatprep.subr.mxu0 0.0
  %1513 = vmatpush1.msra.mxu0 0.0
  %1514 = vmatprep.subr.mxu0 0.0
  %1515 = vmatpush1.msra.mxu0 0.0
  %1516 = vmatprep.subr.mxu0 0.0
  %1517 = vmatpush1.msra.mxu0 0.0
  %1518 = vmatprep.subr.mxu0 0.0
  %1519 = vmatpush1.msra.mxu0 0.0
  %1520 = vmatprep.subr.mxu0 0.0
  %1521 = vmatpush1.msra.mxu0 0.0
  %1522 = vmatprep.subr.mxu0 0.0
  %1523 = vmatpush1.msra.mxu0 0.0
  %1524 = vmatprep.subr.mxu0 0.0
  %1525 = vmatpush1.msra.mxu0 0.0
  %1526 = vmatprep.subr.mxu0 0.0
  %1527 = vmatpush1.msra.mxu0 0.0
  %1528 = vmatprep.subr.mxu0 0.0
  %1529 = vmatpush1.msra.mxu0 0.0
  %1530 = vmatprep.subr.mxu0 0.0
  %1531 = vmatpush1.msra.mxu0 0.0
  %1532 = vmatprep.subr.mxu0 0.0
  %1533 = vmatpush1.msra.mxu0 0.0
  %1534 = vmatprep.subr.mxu0 0.0
  %1535 = vmatpush1.msra.mxu0 0.0
  %1536 = vmatprep.subr.mxu0 0.0
  %1537 = vmatpush1.msra.mxu0 0.0
  %1538 = vmatprep.subr.mxu0 0.0
  %1539 = vmatpush1.msra.mxu0 0.0
  %1540 = vmatprep.subr.mxu0 0.0
  %1541 = vmatpush1.msra.mxu0 0.0
  %1542 = vmatprep.subr.mxu0 0.0
  %1543 = vmatpush1.msra.mxu0 0.0
  %1544 = vmatprep.subr.mxu0 0.0
  %1545 = vmatpush1.msra.mxu0 0.0
  %1546 = vmatprep.subr.mxu0 0.0
  %1547 = vmatpush1.msra.mxu0 0.0
  %1548 = vmatprep.subr.mxu0 0.0
  %1549 = vmatpush1.msra.mxu0 0.0
  %1550 = vmatprep.subr.mxu0 0.0
  %1551 = vmatpush1.msra.mxu0 0.0
  %1552 = vmatprep.subr.mxu0 0.0
  %1553 = vmatpush1.msra.mxu0 0.0
  %1554 = vmatprep.subr.mxu0 0.0
  %1555 = vmatpush1.msra.mxu0 0.0
  %1556 = vmatprep.subr.mxu0 0.0
  %1557 = vmatpush1.msra.mxu0 0.0
  %1558 = vmatprep.subr.mxu0 0.0
  %1559 = vmatpush1.msra.mxu0 0.0
  %1560 = vmatprep.subr.mxu0 0.0
  %1561 = vmatpush1.msra.mxu0 0.0
  %1562 = vmatprep.subr.mxu0 0.0
  %1563 = vmatpush1.msra.mxu0 0.0
  %1564 = vmatprep.subr.mxu0 0.0
  %1565 = vmatpush1.msra.mxu0 0.0
  %1566 = vmatprep.subr.mxu0 0.0
  %1567 = vmatpush1.msra.mxu0 0.0
  %1568 = vmatprep.subr.mxu0 0.0
  %1569 = vmatpush1.msra.mxu0 0.0
  %1570 = vmatprep.subr.mxu0 0.0
  %1571 = vmatpush1.msra.mxu0 0.0
  %1572 = vmatprep.mubr.f32.mxu0 0.0
  %1573 = vmatmul.mubr.f32.gmra.mrb[0].mxu0 %v1506
  %v1574 = vpop.f32.mrb[0].mxu0
  %v1575 = vadd.f32 0.0, %v1574
  %v1576 = vpop.f32.mrb[0].mxu0
  %1577 = vdwg.mxu0
  %v1579 = vrot.slane %v1575, 1
  %v1581 = vadd.f32 %v300, %v1579
  %v1582 = vtanh.pop %v1581
  %1583 = vst.msk [vmem:[#allocation2 + $0x8] sm:$0x80] %vm946, %v1582
  %v1584 = vld [vmem:[#allocation2] sm:$0xff]
  %v1585 = vld [vmem:[#allocation2 + $0x8] sm:$0xff]
  %v1586 = vld [vmem:[%s7] sm:$0xff]
  %v1587 = vld [vmem:[%s7 + $0x8] sm:$0xff]
  %v1589 = vsel %vm126, %v1584, 0
  %v1592 = vsel %vm126, %v1585, 0
  %1594 = vmatprep.subr.mxu0 0.0
  %1595 = vmatpush1.msra.mxu0 %v1586
  %1596 = vmatprep.subr.mxu0 0.0
  %1597 = vmatpush1.msra.mxu0 %v1587
  %1598 = vmatprep.subr.mxu0 0.0
  %1599 = vmatpush1.msra.mxu0 0.0
  %1600 = vmatprep.subr.mxu0 0.0
  %1601 = vmatpush1.msra.mxu0 0.0
  %1602 = vmatprep.subr.mxu0 0.0
  %1603 = vmatpush1.msra.mxu0 0.0
  %1604 = vmatprep.subr.mxu0 0.0
  %1605 = vmatpush1.msra.mxu0 0.0
  %1606 = vmatprep.subr.mxu0 0.0
  %1607 = vmatpush1.msra.mxu0 0.0
  %1608 = vmatprep.subr.mxu0 0.0
  %1609 = vmatpush1.msra.mxu0 0.0
  %1610 = vmatprep.subr.mxu0 0.0
  %1611 = vmatpush1.msra.mxu0 0.0
  %1612 = vmatprep.subr.mxu0 0.0
  %1613 = vmatpush1.msra.mxu0 0.0
  %1614 = vmatprep.subr.mxu0 0.0
  %1615 = vmatpush1.msra.mxu0 0.0
  %1616 = vmatprep.subr.mxu0 0.0
  %1617 = vmatpush1.msra.mxu0 0.0
  %1618 = vmatprep.subr.mxu0 0.0
  %1619 = vmatpush1.msra.mxu0 0.0
  %1620 = vmatprep.subr.mxu0 0.0
  %1621 = vmatpush1.msra.mxu0 0.0
  %1622 = vmatprep.subr.mxu0 0.0
  %1623 = vmatpush1.msra.mxu0 0.0
  %1624 = vmatprep.subr.mxu0 0.0
  %1625 = vmatpush1.msra.mxu0 0.0
  %1626 = vmatprep.subr.mxu0 0.0
  %1627 = vmatpush1.msra.mxu0 0.0
  %1628 = vmatprep.subr.mxu0 0.0
  %1629 = vmatpush1.msra.mxu0 0.0
  %1630 = vmatprep.subr.mxu0 0.0
  %1631 = vmatpush1.msra.mxu0 0.0
  %1632 = vmatprep.subr.mxu0 0.0
  %1633 = vmatpush1.msra.mxu0 0.0
  %1634 = vmatprep.subr.mxu0 0.0
  %1635 = vmatpush1.msra.mxu0 0.0
  %1636 = vmatprep.subr.mxu0 0.0
  %1637 = vmatpush1.msra.mxu0 0.0
  %1638 = vmatprep.subr.mxu0 0.0
  %1639 = vmatpush1.msra.mxu0 0.0
  %1640 = vmatprep.subr.mxu0 0.0
  %1641 = vmatpush1.msra.mxu0 0.0
  %1642 = vmatprep.subr.mxu0 0.0
  %1643 = vmatpush1.msra.mxu0 0.0
  %1644 = vmatprep.subr.mxu0 0.0
  %1645 = vmatpush1.msra.mxu0 0.0
  %1646 = vmatprep.subr.mxu0 0.0
  %1647 = vmatpush1.msra.mxu0 0.0
  %1648 = vmatprep.subr.mxu0 0.0
  %1649 = vmatpush1.msra.mxu0 0.0
  %1650 = vmatprep.subr.mxu0 0.0
  %1651 = vmatpush1.msra.mxu0 0.0
  %1652 = vmatprep.subr.mxu0 0.0
  %1653 = vmatpush1.msra.mxu0 0.0
  %1654 = vmatprep.subr.mxu0 0.0
  %1655 = vmatpush1.msra.mxu0 0.0
  %1656 = vmatprep.subr.mxu0 0.0
  %1657 = vmatpush1.msra.mxu0 0.0
  %1658 = vmatprep.mubr.f32.mxu0 0.0
  %1659 = vmatmul.mubr.f32.gmra.mrb[0].mxu0 %v1589
  %v1660 = vpop.f32.mrb[0].mxu0
  %v1661 = vadd.f32 0.0, %v1660
  %v1662 = vpop.f32.mrb[0].mxu0
  %1663 = vmatprep.mubr.f32.mxu0 0.0
  %1664 = vmatmul.mubr.f32.gmra.mrb[0].mxu0 %v1592
  %v1665 = vpop.f32.mrb[0].mxu0
  %v1666 = vadd.f32 0.0, %v1665
  %v1667 = vpop.f32.mrb[0].mxu0
  %1668 = vdwg.mxu0
  %v1669 = vld [vmem:[%s8] sm:$0x1]
  %v1671 = vlaneseq
  %v1672 = vshrl.u32 %v1671, 7
  %v1673 = vsub.s32 0, %v1672
  %v1674 = vrot.slane %v1669, %v1673
  %1676 = vmatprep.subr.mxu0 0.0
  %1677 = vmatpush1.msra.mxu0 %v1661
  %1678 = vmatprep.subr.mxu0 0.0
  %1679 = vmatpush1.msra.mxu0 %v1666
  %1680 = vmatprep.subr.mxu0 0.0
  %1681 = vmatpush1.msra.mxu0 0.0
  %1682 = vmatprep.subr.mxu0 0.0
  %1683 = vmatpush1.msra.mxu0 0.0
  %1684 = vmatprep.subr.mxu0 0.0
  %1685 = vmatpush1.msra.mxu0 0.0
  %1686 = vmatprep.subr.mxu0 0.0
  %1687 = vmatpush1.msra.mxu0 0.0
  %1688 = vmatprep.subr.mxu0 0.0
  %1689 = vmatpush1.msra.mxu0 0.0
  %1690 = vmatprep.subr.mxu0 0.0
  %1691 = vmatpush1.msra.mxu0 0.0
  %1692 = vmatprep.subr.mxu0 0.0
  %1693 = vmatpush1.msra.mxu0 0.0
  %1694 = vmatprep.subr.mxu0 0.0
  %1695 = vmatpush1.msra.mxu0 0.0
  %1696 = vmatprep.subr.mxu0 0.0
  %1697 = vmatpush1.msra.mxu0 0.0
  %1698 = vmatprep.subr.mxu0 0.0
  %1699 = vmatpush1.msra.mxu0 0.0
  %1700 = vmatprep.subr.mxu0 0.0
  %1701 = vmatpush1.msra.mxu0 0.0
  %1702 = vmatprep.subr.mxu0 0.0
  %1703 = vmatpush1.msra.mxu0 0.0
  %1704 = vmatprep.subr.mxu0 0.0
  %1705 = vmatpush1.msra.mxu0 0.0
  %1706 = vmatprep.subr.mxu0 0.0
  %1707 = vmatpush1.msra.mxu0 0.0
  %1708 = vmatprep.subr.mxu0 0.0
  %1709 = vmatpush1.msra.mxu0 0.0
  %1710 = vmatprep.subr.mxu0 0.0
  %1711 = vmatpush1.msra.mxu0 0.0
  %1712 = vmatprep.subr.mxu0 0.0
  %1713 = vmatpush1.msra.mxu0 0.0
  %1714 = vmatprep.subr.mxu0 0.0
  %1715 = vmatpush1.msra.mxu0 0.0
  %1716 = vmatprep.subr.mxu0 0.0
  %1717 = vmatpush1.msra.mxu0 0.0
  %1718 = vmatprep.subr.mxu0 0.0
  %1719 = vmatpush1.msra.mxu0 0.0
  %1720 = vmatprep.subr.mxu0 0.0
  %1721 = vmatpush1.msra.mxu0 0.0
  %1722 = vmatprep.subr.mxu0 0.0
  %1723 = vmatpush1.msra.mxu0 0.0
  %1724 = vmatprep.subr.mxu0 0.0
  %1725 = vmatpush1.msra.mxu0 0.0
  %1726 = vmatprep.subr.mxu0 0.0
  %1727 = vmatpush1.msra.mxu0 0.0
  %1728 = vmatprep.subr.mxu0 0.0
  %1729 = vmatpush1.msra.mxu0 0.0
  %1730 = vmatprep.subr.mxu0 0.0
  %1731 = vmatpush1.msra.mxu0 0.0
  %1732 = vmatprep.subr.mxu0 0.0
  %1733 = vmatpush1.msra.mxu0 0.0
  %1734 = vmatprep.subr.mxu0 0.0
  %1735 = vmatpush1.msra.mxu0 0.0
  %1736 = vmatprep.subr.mxu0 0.0
  %1737 = vmatpush1.msra.mxu0 0.0
  %1738 = vmatprep.subr.mxu0 0.0
  %1739 = vmatpush1.msra.mxu0 0.0
  %1740 = vmatprep.mubr.f32.mxu0 0.0
  %1741 = vmatmul.mubr.f32.gmra.mrb[0].mxu0 %v128
  %v1742 = vpop.f32.mrb[0].mxu0
  %v1743 = vadd.f32 %v1674, %v1742
  %v1744 = vpop.f32.mrb[0].mxu0
  %1745 = vmatprep.mubr.f32.mxu0 0.0
  %1746 = vmatmul.mubr.f32.gmra.mrb[0].mxu0 %v131
  %v1747 = vpop.f32.mrb[0].mxu0
  %v1748 = vadd.f32 %v1674, %v1747
  %v1749 = vpop.f32.mrb[0].mxu0
  %1750 = vdwg.mxu0
  %vm1751 = vcmask 15360
  %1752 = vst.msk [vmem:[%s9] sm:$0xff] %vm1751, %v1743
  %1753 = vst.msk [vmem:[%s9 + $0x8] sm:$0xff] %vm1751, %v1748
  // Predicated region
  $region38: #{gcrnn_forward.1} parent=0 // pred_check
    _
  $region39: #{gcrnn_forward.1} parent=0 // pred_check_branch
    %1755 = sbr.rel (0) target = $region41
  $region40: #{gcrnn_forward.1} parent=0 // pred_region
    _
  $region41: #{gcrnn_forward.1} parent=0 // pred_fallthru
    _
  // Predicated region
  $region42: #{gcrnn_forward.1} parent=0 // pred_check
    _
  $region43: #{gcrnn_forward.1} parent=0 // pred_check_branch
    %1757 = sbr.rel (0) target = $region45
  $region44: #{gcrnn_forward.1} parent=0 // pred_region
    _
  $region45: #{gcrnn_forward.1} parent=0 // pred_fallthru
    _

</llo_original>
